<compile_context>
chip_gen: v7x
topology: tpu7x:2x2x1
jax: 0.10.0
libtpu: 0.0.40
codegen_flags: <defaults>
</compile_context>

<pallas_src>
import functools

import jax
import jax.numpy as jnp
from jax.experimental import pallas as pl
from jax.experimental.pallas import tpu as pltpu


def _round_up(x, m):
    return ((x + m - 1) // m) * m


def _im2col(x, kh, kw, stride, pad):
    """x: (N, H, W, C) -> patches (N*Ho*Wo, kh*kw*C), plus output geometry."""
    n, h, w, c = x.shape
    xp = jnp.pad(x, ((0, 0), (pad, pad), (pad, pad), (0, 0)))
    ho = (h + 2 * pad - kh) // stride + 1
    wo = (w + 2 * pad - kw) // stride + 1
    cols = []
    for dy in range(kh):
        for dx in range(kw):
            patch = jax.lax.slice(
                xp,
                (0, dy, dx, 0),
                (n, dy + (ho - 1) * stride + 1, dx + (wo - 1) * stride + 1, c),
                (1, stride, stride, 1),
            )
            cols.append(patch)
    patches = jnp.concatenate(cols, axis=-1)  # (N, Ho, Wo, kh*kw*C)
    return patches.reshape(n * ho * wo, kh * kw * c), (n, ho, wo)


# ----------------------------- Pallas kernels ------------------------------


def _conv_mm_kernel(p_ref, w_ref, b_ref, o_ref, *, relu):
    # (TM, K) bf16 @ (K, Cout) bf16 -> f32 on the MXU; bias + ReLU on the VPU.
    acc = jnp.dot(p_ref[...], w_ref[...], preferred_element_type=jnp.float32)
    acc = acc + b_ref[...]
    if relu:
        acc = jnp.maximum(acc, 0.0)
    o_ref[...] = acc


def _l1_kernel(a_ref, b_ref, o_ref, acc_ref, *, inv_numel):
    # Streaming |a-b| sum over lane-dense (TR, 128) tiles.  Zero padding
    # cancels (|0-0| = 0) and we divide by the true element count at the end.
    step = pl.program_id(0)

    @pl.when(step == 0)
    def _():
        acc_ref[...] = jnp.zeros_like(acc_ref)

    acc_ref[...] = acc_ref[...] + jnp.sum(jnp.abs(a_ref[...] - b_ref[...]))

    @pl.when(step == pl.num_programs(0) - 1)
    def _():
        o_ref[...] = acc_ref[...] * inv_numel


# ------------------------------ host wrappers -------------------------------


def conv2d_pallas(x, w, b, *, stride, pad, relu=True):
    """x: (N, H, W, Cin); w: (kh, kw, Cin, Cout); b: (Cout,) -> (N, Ho, Wo, Cout)."""
    kh, kw, cin, cout = w.shape
    patches, (n, ho, wo) = _im2col(x, kh, kw, stride, pad)
    m, k = patches.shape

    # Row tile: keep <= 512 (v5e-friendly), multiple of 16 (bf16 sublane pack).
    tm = 512
    if m <= tm:
        tm = max(16, _round_up(m, 16))
    mp = _round_up(m, tm)
    grid_m = mp // tm

    # Only pad M; K and Cout keep their true extents (block == full array dim).
    p_p = jnp.pad(patches, ((0, mp - m), (0, 0))).astype(jnp.bfloat16)
    w2 = w.reshape(k, cout).astype(jnp.bfloat16)
    b2 = b.reshape(1, cout).astype(jnp.float32)

    # VMEM budget: double-buffered patch + output tiles, resident weights/bias.
    tile_bytes = tm * k * 2 + tm * cout * 4 + k * cout * 2 + cout * 4
    vmem_limit = int(min(max(4 * tile_bytes + (4 << 20), 16 << 20), 48 << 20))

    out = pl.pallas_call(
        functools.partial(_conv_mm_kernel, relu=relu),
        out_shape=jax.ShapeDtypeStruct((mp, cout), jnp.float32),
        grid=(grid_m,),
        in_specs=[
            pl.BlockSpec((tm, k), lambda i: (i, 0)),       # streamed patches
            pl.BlockSpec((k, cout), lambda i: (0, 0)),     # resident weights
            pl.BlockSpec((1, cout), lambda i: (0, 0)),     # resident bias
        ],
        out_specs=pl.BlockSpec((tm, cout), lambda i: (i, 0)),
        compiler_params=pltpu.CompilerParams(
            dimension_semantics=("parallel",),
            vmem_limit_bytes=vmem_limit,
        ),
    )(p_p, w2, b2)

    return out[:m].reshape(n, ho, wo, cout)


def l1_mean_pallas(a, b):
    """torch.nn.L1Loss() (reduction='mean') on same-shaped feature tensors."""
    numel = a.size
    af = a.reshape(-1).astype(jnp.float32)
    bf = b.reshape(-1).astype(jnp.float32)

    rows = (numel + 127) // 128
    tr = 512 if rows > 512 else max(8, _round_up(rows, 8))
    rows_p = _round_up(rows, tr)
    pad_amt = rows_p * 128 - numel

    a2 = jnp.pad(af, (0, pad_amt)).reshape(rows_p, 128)
    b2 = jnp.pad(bf, (0, pad_amt)).reshape(rows_p, 128)

    tile_bytes = 2 * tr * 128 * 4
    vmem_limit = int(min(max(4 * tile_bytes + (4 << 20), 16 << 20), 48 << 20))

    out = pl.pallas_call(
        functools.partial(_l1_kernel, inv_numel=1.0 / float(numel)),
        out_shape=jax.ShapeDtypeStruct((1, 1), jnp.float32),
        grid=(rows_p // tr,),
        in_specs=[
            pl.BlockSpec((tr, 128), lambda i: (i, 0)),
            pl.BlockSpec((tr, 128), lambda i: (i, 0)),
        ],
        out_specs=pl.BlockSpec((1, 1), lambda i: (0, 0)),
        scratch_shapes=[pltpu.VMEM((1, 1), jnp.float32)],
        compiler_params=pltpu.CompilerParams(
            dimension_semantics=("arbitrary",),
            vmem_limit_bytes=vmem_limit,
        ),
    )(a2, b2)
    return out[0, 0]


# --------------------------- synthetic encoder ------------------------------


def init_encoder_params(key):
    """Deterministic synthetic stand-in for resnet50_256 slices (3x3 convs)."""
    c_in, c1, c2, c3 = 3, 8, 16, 32
    keys = jax.random.split(key, 12)

    def conv_p(kw_, kb_, kh, kw, ci, co):
        w = 0.1 * jax.random.normal(kw_, (kh, kw, ci, co), jnp.float32)
        b = 0.05 * jax.random.normal(kb_, (co,), jnp.float32)
        return w, b

    return {
        "slice1": conv_p(keys[0], keys[1], 3, 3, c_in, c1),   # stride 2
        "slice2": conv_p(keys[2], keys[3], 3, 3, c1, c2),     # stride 2
        "slice3": conv_p(keys[4], keys[5], 3, 3, c2, c3),     # stride 2
        "slice4": conv_p(keys[6], keys[7], 3, 3, c3, c3),     # stride 1
        "slice5": conv_p(keys[8], keys[9], 3, 3, c1, c3),     # stride 4 (from h1)
        "slice6": conv_p(keys[10], keys[11], 3, 3, c3, c3),   # stride 1
    }


def vgg_encoder_forward(params, images_nchw, output_last_feature=False):
    # NCHW (PyTorch) -> NHWC (kernel layout)
    x = jnp.transpose(images_nchw, (0, 2, 3, 1)).astype(jnp.float32)

    w, b = params["slice1"]
    h1 = conv2d_pallas(x, w, b, stride=2, pad=1, relu=True)
    w, b = params["slice2"]
    h2 = conv2d_pallas(h1, w, b, stride=2, pad=1, relu=True)
    w, b = params["slice3"]
    h3 = conv2d_pallas(h2, w, b, stride=2, pad=1, relu=True)
    w, b = params["slice4"]
    h4 = conv2d_pallas(h3, w, b, stride=1, pad=1, relu=True)
    w, b = params["slice5"]
    h5 = conv2d_pallas(h1, w, b, stride=4, pad=1, relu=False)
    assert h4.shape == h5.shape, (h4.shape, h5.shape)  # h6 = h4 + h5 wiring
    h6 = h4 + h5
    w, b = params["slice6"]
    h4f = conv2d_pallas(h6, w, b, stride=1, pad=1, relu=True)

    if output_last_feature:
        return h4f
    return h1, h2, h3, h4f


def perceptual_loss(params, image_1, image_2):
    n = image_1.shape[0]
    # Batch both images through the encoder in one pass (half the launches).
    images = jnp.concatenate([image_1, image_2], axis=0)
    feats = vgg_encoder_forward(params, images)
    total = 0.0
    for f in feats:
        total = total + l1_mean_pallas(f[:n], f[n:])
    return total


if __name__ == "__main__":
    key = jax.random.PRNGKey(0)
    k1, k2, kp = jax.random.split(key, 3)
    image_1 = jax.random.uniform(k1, (2, 3, 16, 16), dtype=jnp.float32)
    image_2 = jax.random.uniform(k2, (2, 3, 16, 16), dtype=jnp.float32)
    params = init_encoder_params(kp)

    loss_fn = jax.jit(perceptual_loss)
    loss = loss_fn(params, image_1, image_2)
    jax.block_until_ready(loss)
    assert loss.shape == (), loss.shape
    assert bool(jnp.isfinite(loss)), loss
    print("KERNEL_OK")
</pallas_src>

<mosaic_0001>
module attributes {stable_mosaic.version = 11 : i64} {
  func.func @_conv_mm_kernel(%arg0: i32, %arg1: memref<256x27xbf16, #tpu.memory_space<vmem>>, %arg2: memref<27x8xbf16, #tpu.memory_space<vmem>>, %arg3: memref<1x8xf32, #tpu.memory_space<vmem>>, %arg4: memref<256x8xf32, #tpu.memory_space<vmem>>) attributes {dimension_semantics = [#tpu.dimension_semantics<parallel>], iteration_bounds = array<i64: 1>, scalar_prefetch = 0 : i64, scratch_operands = 0 : i64, tpu.core_type = #tpu.core_type<tc>, window_params = [{transform_indices = @transform_0, window_bounds = array<i64: 256, 27>}, {pipeline_mode = #tpu.pipeline_mode<synchronous>, transform_indices = @transform_1, window_bounds = array<i64: 27, 8>}, {pipeline_mode = #tpu.pipeline_mode<synchronous>, transform_indices = @transform_2, window_bounds = array<i64: 1, 8>}, {transform_indices = @transform_3, window_bounds = array<i64: 256, 8>}]} {
    %c0 = arith.constant 0 : index
    %c0_0 = arith.constant 0 : index
    %0 = vector.load %arg1[%c0, %c0_0] : memref<256x27xbf16, #tpu.memory_space<vmem>>, vector<256x27xbf16>
    %c0_1 = arith.constant 0 : index
    %c0_2 = arith.constant 0 : index
    %1 = vector.load %arg2[%c0_1, %c0_2] : memref<27x8xbf16, #tpu.memory_space<vmem>>, vector<27x8xbf16>
    %cst = arith.constant dense<0.000000e+00> : vector<256x8xf32>
    %2 = tpu.matmul %0, %1, %cst {dimension_numbers = #tpu.dot_dimension_numbers<[1], [0], [0], [1], [0, 0, 1, 1], [], []>} : vector<256x27xbf16>, vector<27x8xbf16>, vector<256x8xf32> -> vector<256x8xf32>
    %c0_3 = arith.constant 0 : index
    %c0_4 = arith.constant 0 : index
    %3 = vector.load %arg3[%c0_3, %c0_4] : memref<1x8xf32, #tpu.memory_space<vmem>>, vector<1x8xf32>
    %4 = vector.broadcast %3 : vector<1x8xf32> to vector<256x8xf32>
    %5 = arith.addf %2, %4 : vector<256x8xf32>
    %cst_5 = arith.constant 0.000000e+00 : f32
    %6 = vector.broadcast %cst_5 : f32 to vector<256x8xf32>
    %7 = arith.maximumf %5, %6 : vector<256x8xf32>
    %c0_6 = arith.constant 0 : index
    %c0_7 = arith.constant 0 : index
    %8 = vector.load %arg4[%c0_6, %c0_7] : memref<256x8xf32, #tpu.memory_space<vmem>>, vector<256x8xf32>
    tpu.vector_store %arg4[%c0_6, %c0_7], %7 {strides = array<i32>} : memref<256x8xf32, #tpu.memory_space<vmem>>, vector<256x8xf32>,
    return
  }
  func.func @transform_0(%arg0: i32) -> (i32, i32) {
    %c0_i32 = arith.constant 0 : i32
    %c0_i32_0 = arith.constant 0 : i32
    return %arg0, %c0_i32 : i32, i32
  }
  func.func @transform_1(%arg0: i32) -> (i32, i32) {
    %c0_i32 = arith.constant 0 : i32
    %c0_i32_0 = arith.constant 0 : i32
    %c0_i32_1 = arith.constant 0 : i32
    return %c0_i32, %c0_i32_0 : i32, i32
  }
  func.func @transform_2(%arg0: i32) -> (i32, i32) {
    %c0_i32 = arith.constant 0 : i32
    %c0_i32_0 = arith.constant 0 : i32
    %c0_i32_1 = arith.constant 0 : i32
    return %c0_i32, %c0_i32_0 : i32, i32
  }
  func.func @transform_3(%arg0: i32) -> (i32, i32) {
    %c0_i32 = arith.constant 0 : i32
    %c0_i32_0 = arith.constant 0 : i32
    return %arg0, %c0_i32 : i32, i32
  }
}

module attributes {stable_mosaic.version = 11 : i64} {
  func.func @_conv_mm_kernel(%arg0: i32, %arg1: memref<16x72xbf16, #tpu.memory_space<vmem>>, %arg2: memref<72x32xbf16, #tpu.memory_space<vmem>>, %arg3: memref<1x32xf32, #tpu.memory_space<vmem>>, %arg4: memref<16x32xf32, #tpu.memory_space<vmem>>) attributes {dimension_semantics = [#tpu.dimension_semantics<parallel>], iteration_bounds = array<i64: 1>, scalar_prefetch = 0 : i64, scratch_operands = 0 : i64, tpu.core_type = #tpu.core_type<tc>, window_params = [{transform_indices = @transform_0, window_bounds = array<i64: 16, 72>}, {pipeline_mode = #tpu.pipeline_mode<synchronous>, transform_indices = @transform_1, window_bounds = array<i64: 72, 32>}, {pipeline_mode = #tpu.pipeline_mode<synchronous>, transform_indices = @transform_2, window_bounds = array<i64: 1, 32>}, {transform_indices = @transform_3, window_bounds = array<i64: 16, 32>}]} {
    %c0 = arith.constant 0 : index
    %c0_0 = arith.constant 0 : index
    %0 = vector.load %arg1[%c0, %c0_0] : memref<16x72xbf16, #tpu.memory_space<vmem>>, vector<16x72xbf16>
    %c0_1 = arith.constant 0 : index
    %c0_2 = arith.constant 0 : index
    %1 = vector.load %arg2[%c0_1, %c0_2] : memref<72x32xbf16, #tpu.memory_space<vmem>>, vector<72x32xbf16>
    %cst = arith.constant dense<0.000000e+00> : vector<16x32xf32>
    %2 = tpu.matmul %0, %1, %cst {dimension_numbers = #tpu.dot_dimension_numbers<[1], [0], [0], [1], [0, 0, 1, 1], [], []>} : vector<16x72xbf16>, vector<72x32xbf16>, vector<16x32xf32> -> vector<16x32xf32>
    %c0_3 = arith.constant 0 : index
    %c0_4 = arith.constant 0 : index
    %3 = vector.load %arg3[%c0_3, %c0_4] : memref<1x32xf32, #tpu.memory_space<vmem>>, vector<1x32xf32>
    %4 = vector.broadcast %3 : vector<1x32xf32> to vector<16x32xf32>
    %5 = arith.addf %2, %4 : vector<16x32xf32>
    %c0_5 = arith.constant 0 : index
    %c0_6 = arith.constant 0 : index
    %6 = vector.load %arg4[%c0_5, %c0_6] : memref<16x32xf32, #tpu.memory_space<vmem>>, vector<16x32xf32>
    tpu.vector_store %arg4[%c0_5, %c0_6], %5 {strides = array<i32>} : memref<16x32xf32, #tpu.memory_space<vmem>>, vector<16x32xf32>,
    return
  }
  func.func @transform_0(%arg0: i32) -> (i32, i32) {
    %c0_i32 = arith.constant 0 : i32
    %c0_i32_0 = arith.constant 0 : i32
    return %arg0, %c0_i32 : i32, i32
  }
  func.func @transform_1(%arg0: i32) -> (i32, i32) {
    %c0_i32 = arith.constant 0 : i32
    %c0_i32_0 = arith.constant 0 : i32
    %c0_i32_1 = arith.constant 0 : i32
    return %c0_i32, %c0_i32_0 : i32, i32
  }
  func.func @transform_2(%arg0: i32) -> (i32, i32) {
    %c0_i32 = arith.constant 0 : i32
    %c0_i32_0 = arith.constant 0 : i32
    %c0_i32_1 = arith.constant 0 : i32
    return %c0_i32, %c0_i32_0 : i32, i32
  }
  func.func @transform_3(%arg0: i32) -> (i32, i32) {
    %c0_i32 = arith.constant 0 : i32
    %c0_i32_0 = arith.constant 0 : i32
    return %arg0, %c0_i32 : i32, i32
  }
}

module attributes {stable_mosaic.version = 11 : i64} {
  func.func @_conv_mm_kernel(%arg0: i32, %arg1: memref<64x72xbf16, #tpu.memory_space<vmem>>, %arg2: memref<72x16xbf16, #tpu.memory_space<vmem>>, %arg3: memref<1x16xf32, #tpu.memory_space<vmem>>, %arg4: memref<64x16xf32, #tpu.memory_space<vmem>>) attributes {dimension_semantics = [#tpu.dimension_semantics<parallel>], iteration_bounds = array<i64: 1>, scalar_prefetch = 0 : i64, scratch_operands = 0 : i64, tpu.core_type = #tpu.core_type<tc>, window_params = [{transform_indices = @transform_0, window_bounds = array<i64: 64, 72>}, {pipeline_mode = #tpu.pipeline_mode<synchronous>, transform_indices = @transform_1, window_bounds = array<i64: 72, 16>}, {pipeline_mode = #tpu.pipeline_mode<synchronous>, transform_indices = @transform_2, window_bounds = array<i64: 1, 16>}, {transform_indices = @transform_3, window_bounds = array<i64: 64, 16>}]} {
    %c0 = arith.constant 0 : index
    %c0_0 = arith.constant 0 : index
    %0 = vector.load %arg1[%c0, %c0_0] : memref<64x72xbf16, #tpu.memory_space<vmem>>, vector<64x72xbf16>
    %c0_1 = arith.constant 0 : index
    %c0_2 = arith.constant 0 : index
    %1 = vector.load %arg2[%c0_1, %c0_2] : memref<72x16xbf16, #tpu.memory_space<vmem>>, vector<72x16xbf16>
    %cst = arith.constant dense<0.000000e+00> : vector<64x16xf32>
    %2 = tpu.matmul %0, %1, %cst {dimension_numbers = #tpu.dot_dimension_numbers<[1], [0], [0], [1], [0, 0, 1, 1], [], []>} : vector<64x72xbf16>, vector<72x16xbf16>, vector<64x16xf32> -> vector<64x16xf32>
    %c0_3 = arith.constant 0 : index
    %c0_4 = arith.constant 0 : index
    %3 = vector.load %arg3[%c0_3, %c0_4] : memref<1x16xf32, #tpu.memory_space<vmem>>, vector<1x16xf32>
    %4 = vector.broadcast %3 : vector<1x16xf32> to vector<64x16xf32>
    %5 = arith.addf %2, %4 : vector<64x16xf32>
    %cst_5 = arith.constant 0.000000e+00 : f32
    %6 = vector.broadcast %cst_5 : f32 to vector<64x16xf32>
    %7 = arith.maximumf %5, %6 : vector<64x16xf32>
    %c0_6 = arith.constant 0 : index
    %c0_7 = arith.constant 0 : index
    %8 = vector.load %arg4[%c0_6, %c0_7] : memref<64x16xf32, #tpu.memory_space<vmem>>, vector<64x16xf32>
    tpu.vector_store %arg4[%c0_6, %c0_7], %7 {strides = array<i32>} : memref<64x16xf32, #tpu.memory_space<vmem>>, vector<64x16xf32>,
    return
  }
  func.func @transform_0(%arg0: i32) -> (i32, i32) {
    %c0_i32 = arith.constant 0 : i32
    %c0_i32_0 = arith.constant 0 : i32
    return %arg0, %c0_i32 : i32, i32
  }
  func.func @transform_1(%arg0: i32) -> (i32, i32) {
    %c0_i32 = arith.constant 0 : i32
    %c0_i32_0 = arith.constant 0 : i32
    %c0_i32_1 = arith.constant 0 : i32
    return %c0_i32, %c0_i32_0 : i32, i32
  }
  func.func @transform_2(%arg0: i32) -> (i32, i32) {
    %c0_i32 = arith.constant 0 : i32
    %c0_i32_0 = arith.constant 0 : i32
    %c0_i32_1 = arith.constant 0 : i32
    return %c0_i32, %c0_i32_0 : i32, i32
  }
  func.func @transform_3(%arg0: i32) -> (i32, i32) {
    %c0_i32 = arith.constant 0 : i32
    %c0_i32_0 = arith.constant 0 : i32
    return %arg0, %c0_i32 : i32, i32
  }
}

module attributes {stable_mosaic.version = 11 : i64} {
  func.func @_conv_mm_kernel(%arg0: i32, %arg1: memref<16x144xbf16, #tpu.memory_space<vmem>>, %arg2: memref<144x32xbf16, #tpu.memory_space<vmem>>, %arg3: memref<1x32xf32, #tpu.memory_space<vmem>>, %arg4: memref<16x32xf32, #tpu.memory_space<vmem>>) attributes {dimension_semantics = [#tpu.dimension_semantics<parallel>], iteration_bounds = array<i64: 1>, scalar_prefetch = 0 : i64, scratch_operands = 0 : i64, tpu.core_type = #tpu.core_type<tc>, window_params = [{transform_indices = @transform_0, window_bounds = array<i64: 16, 144>}, {pipeline_mode = #tpu.pipeline_mode<synchronous>, transform_indices = @transform_1, window_bounds = array<i64: 144, 32>}, {pipeline_mode = #tpu.pipeline_mode<synchronous>, transform_indices = @transform_2, window_bounds = array<i64: 1, 32>}, {transform_indices = @transform_3, window_bounds = array<i64: 16, 32>}]} {
    %c0 = arith.constant 0 : index
    %c0_0 = arith.constant 0 : index
    %0 = vector.load %arg1[%c0, %c0_0] : memref<16x144xbf16, #tpu.memory_space<vmem>>, vector<16x144xbf16>
    %c0_1 = arith.constant 0 : index
    %c0_2 = arith.constant 0 : index
    %1 = vector.load %arg2[%c0_1, %c0_2] : memref<144x32xbf16, #tpu.memory_space<vmem>>, vector<144x32xbf16>
    %cst = arith.constant dense<0.000000e+00> : vector<16x32xf32>
    %2 = tpu.matmul %0, %1, %cst {dimension_numbers = #tpu.dot_dimension_numbers<[1], [0], [0], [1], [0, 0, 1, 1], [], []>} : vector<16x144xbf16>, vector<144x32xbf16>, vector<16x32xf32> -> vector<16x32xf32>
    %c0_3 = arith.constant 0 : index
    %c0_4 = arith.constant 0 : index
    %3 = vector.load %arg3[%c0_3, %c0_4] : memref<1x32xf32, #tpu.memory_space<vmem>>, vector<1x32xf32>
    %4 = vector.broadcast %3 : vector<1x32xf32> to vector<16x32xf32>
    %5 = arith.addf %2, %4 : vector<16x32xf32>
    %cst_5 = arith.constant 0.000000e+00 : f32
    %6 = vector.broadcast %cst_5 : f32 to vector<16x32xf32>
    %7 = arith.maximumf %5, %6 : vector<16x32xf32>
    %c0_6 = arith.constant 0 : index
    %c0_7 = arith.constant 0 : index
    %8 = vector.load %arg4[%c0_6, %c0_7] : memref<16x32xf32, #tpu.memory_space<vmem>>, vector<16x32xf32>
    tpu.vector_store %arg4[%c0_6, %c0_7], %7 {strides = array<i32>} : memref<16x32xf32, #tpu.memory_space<vmem>>, vector<16x32xf32>,
    return
  }
  func.func @transform_0(%arg0: i32) -> (i32, i32) {
    %c0_i32 = arith.constant 0 : i32
    %c0_i32_0 = arith.constant 0 : i32
    return %arg0, %c0_i32 : i32, i32
  }
  func.func @transform_1(%arg0: i32) -> (i32, i32) {
    %c0_i32 = arith.constant 0 : i32
    %c0_i32_0 = arith.constant 0 : i32
    %c0_i32_1 = arith.constant 0 : i32
    return %c0_i32, %c0_i32_0 : i32, i32
  }
  func.func @transform_2(%arg0: i32) -> (i32, i32) {
    %c0_i32 = arith.constant 0 : i32
    %c0_i32_0 = arith.constant 0 : i32
    %c0_i32_1 = arith.constant 0 : i32
    return %c0_i32, %c0_i32_0 : i32, i32
  }
  func.func @transform_3(%arg0: i32) -> (i32, i32) {
    %c0_i32 = arith.constant 0 : i32
    %c0_i32_0 = arith.constant 0 : i32
    return %arg0, %c0_i32 : i32, i32
  }
}

module attributes {stable_mosaic.version = 11 : i64} {
  func.func @_conv_mm_kernel(%arg0: i32, %arg1: memref<16x288xbf16, #tpu.memory_space<vmem>>, %arg2: memref<288x32xbf16, #tpu.memory_space<vmem>>, %arg3: memref<1x32xf32, #tpu.memory_space<vmem>>, %arg4: memref<16x32xf32, #tpu.memory_space<vmem>>) attributes {dimension_semantics = [#tpu.dimension_semantics<parallel>], iteration_bounds = array<i64: 1>, scalar_prefetch = 0 : i64, scratch_operands = 0 : i64, tpu.core_type = #tpu.core_type<tc>, window_params = [{transform_indices = @transform_0, window_bounds = array<i64: 16, 288>}, {pipeline_mode = #tpu.pipeline_mode<synchronous>, transform_indices = @transform_1, window_bounds = array<i64: 288, 32>}, {pipeline_mode = #tpu.pipeline_mode<synchronous>, transform_indices = @transform_2, window_bounds = array<i64: 1, 32>}, {transform_indices = @transform_3, window_bounds = array<i64: 16, 32>}]} {
    %c0 = arith.constant 0 : index
    %c0_0 = arith.constant 0 : index
    %0 = vector.load %arg1[%c0, %c0_0] : memref<16x288xbf16, #tpu.memory_space<vmem>>, vector<16x288xbf16>
    %c0_1 = arith.constant 0 : index
    %c0_2 = arith.constant 0 : index
    %1 = vector.load %arg2[%c0_1, %c0_2] : memref<288x32xbf16, #tpu.memory_space<vmem>>, vector<288x32xbf16>
    %cst = arith.constant dense<0.000000e+00> : vector<16x32xf32>
    %2 = tpu.matmul %0, %1, %cst {dimension_numbers = #tpu.dot_dimension_numbers<[1], [0], [0], [1], [0, 0, 1, 1], [], []>} : vector<16x288xbf16>, vector<288x32xbf16>, vector<16x32xf32> -> vector<16x32xf32>
    %c0_3 = arith.constant 0 : index
    %c0_4 = arith.constant 0 : index
    %3 = vector.load %arg3[%c0_3, %c0_4] : memref<1x32xf32, #tpu.memory_space<vmem>>, vector<1x32xf32>
    %4 = vector.broadcast %3 : vector<1x32xf32> to vector<16x32xf32>
    %5 = arith.addf %2, %4 : vector<16x32xf32>
    %cst_5 = arith.constant 0.000000e+00 : f32
    %6 = vector.broadcast %cst_5 : f32 to vector<16x32xf32>
    %7 = arith.maximumf %5, %6 : vector<16x32xf32>
    %c0_6 = arith.constant 0 : index
    %c0_7 = arith.constant 0 : index
    %8 = vector.load %arg4[%c0_6, %c0_7] : memref<16x32xf32, #tpu.memory_space<vmem>>, vector<16x32xf32>
    tpu.vector_store %arg4[%c0_6, %c0_7], %7 {strides = array<i32>} : memref<16x32xf32, #tpu.memory_space<vmem>>, vector<16x32xf32>,
    return
  }
  func.func @transform_0(%arg0: i32) -> (i32, i32) {
    %c0_i32 = arith.constant 0 : i32
    %c0_i32_0 = arith.constant 0 : i32
    return %arg0, %c0_i32 : i32, i32
  }
  func.func @transform_1(%arg0: i32) -> (i32, i32) {
    %c0_i32 = arith.constant 0 : i32
    %c0_i32_0 = arith.constant 0 : i32
    %c0_i32_1 = arith.constant 0 : i32
    return %c0_i32, %c0_i32_0 : i32, i32
  }
  func.func @transform_2(%arg0: i32) -> (i32, i32) {
    %c0_i32 = arith.constant 0 : i32
    %c0_i32_0 = arith.constant 0 : i32
    %c0_i32_1 = arith.constant 0 : i32
    return %c0_i32, %c0_i32_0 : i32, i32
  }
  func.func @transform_3(%arg0: i32) -> (i32, i32) {
    %c0_i32 = arith.constant 0 : i32
    %c0_i32_0 = arith.constant 0 : i32
    return %arg0, %c0_i32 : i32, i32
  }
}

module attributes {stable_mosaic.version = 11 : i64} {
  func.func @_l1_kernel(%arg0: i32, %arg1: memref<8x128xf32, #tpu.memory_space<vmem>>, %arg2: memref<8x128xf32, #tpu.memory_space<vmem>>, %arg3: memref<1x1xf32, #tpu.memory_space<vmem>>, %arg4: memref<1x1xf32, #tpu.memory_space<vmem>>) attributes {dimension_semantics = [#tpu.dimension_semantics<arbitrary>], iteration_bounds = array<i64: 1>, scalar_prefetch = 0 : i64, scratch_operands = 1 : i64, tpu.core_type = #tpu.core_type<tc>, window_params = [{transform_indices = @transform_0, window_bounds = array<i64: 8, 128>}, {transform_indices = @transform_1, window_bounds = array<i64: 8, 128>}, {pipeline_mode = #tpu.pipeline_mode<synchronous>, transform_indices = @transform_2, window_bounds = array<i64: 1, 1>}]} {
    %c0_i32 = arith.constant 0 : i32
    %0 = arith.cmpi eq, %arg0, %c0_i32 : i32
    %1 = arith.extui %0 : i1 to i32
    %c0_i32_0 = arith.constant 0 : i32
    %2 = arith.cmpi ne, %1, %c0_i32_0 : i32
    scf.if %2 {
      %cst_10 = arith.constant 0.000000e+00 : f32
      %18 = vector.broadcast %cst_10 : f32 to vector<1x1xf32>
      %c0_11 = arith.constant 0 : index
      %c0_12 = arith.constant 0 : index
      %19 = vector.load %arg4[%c0_11, %c0_12] : memref<1x1xf32, #tpu.memory_space<vmem>>, vector<1x1xf32>
      tpu.vector_store %arg4[%c0_11, %c0_12], %18 {strides = array<i32>} : memref<1x1xf32, #tpu.memory_space<vmem>>, vector<1x1xf32>,
    } else {
    }
    %c0 = arith.constant 0 : index
    %c0_1 = arith.constant 0 : index
    %3 = vector.load %arg4[%c0, %c0_1] : memref<1x1xf32, #tpu.memory_space<vmem>>, vector<1x1xf32>
    %c0_2 = arith.constant 0 : index
    %c0_3 = arith.constant 0 : index
    %4 = vector.load %arg1[%c0_2, %c0_3] : memref<8x128xf32, #tpu.memory_space<vmem>>, vector<8x128xf32>
    %c0_4 = arith.constant 0 : index
    %c0_5 = arith.constant 0 : index
    %5 = vector.load %arg2[%c0_4, %c0_5] : memref<8x128xf32, #tpu.memory_space<vmem>>, vector<8x128xf32>
    %6 = arith.subf %4, %5 : vector<8x128xf32>
    %7 = math.absf %6 : vector<8x128xf32>
    %8 = vector.shape_cast %7 : vector<8x128xf32> to vector<1x8x128xf32>
    %cst = arith.constant dense<0.000000e+00> : vector<1xf32>
    %9 = vector.multi_reduction <add>, %8, %cst [1, 2] : vector<1x8x128xf32> to vector<1xf32>
    %10 = vector.shape_cast %9 : vector<1xf32> to vector<1x1x1xf32>
    %11 = vector.extract %10[0, 0, 0] : f32 from vector<1x1x1xf32>
    %12 = vector.broadcast %11 : f32 to vector<1x1xf32>
    %13 = arith.addf %3, %12 : vector<1x1xf32>
    %c0_6 = arith.constant 0 : index
    %c0_7 = arith.constant 0 : index
    %14 = vector.load %arg4[%c0_6, %c0_7] : memref<1x1xf32, #tpu.memory_space<vmem>>, vector<1x1xf32>
    tpu.vector_store %arg4[%c0_6, %c0_7], %13 {strides = array<i32>} : memref<1x1xf32, #tpu.memory_space<vmem>>, vector<1x1xf32>,
    %c0_i32_8 = arith.constant 0 : i32
    %15 = arith.cmpi eq, %arg0, %c0_i32_8 : i32
    %16 = arith.extui %15 : i1 to i32
    %c0_i32_9 = arith.constant 0 : i32
    %17 = arith.cmpi ne, %16, %c0_i32_9 : i32
    scf.if %17 {
      %c0_10 = arith.constant 0 : index
      %c0_11 = arith.constant 0 : index
      %18 = vector.load %arg4[%c0_10, %c0_11] : memref<1x1xf32, #tpu.memory_space<vmem>>, vector<1x1xf32>
      %cst_12 = arith.constant 3.906250e-03 : f32
      %19 = vector.broadcast %cst_12 : f32 to vector<1x1xf32>
      %20 = arith.mulf %18, %19 : vector<1x1xf32>
      %c0_13 = arith.constant 0 : index
      %c0_14 = arith.constant 0 : index
      %21 = vector.load %arg3[%c0_13, %c0_14] : memref<1x1xf32, #tpu.memory_space<vmem>>, vector<1x1xf32>
      tpu.vector_store %arg3[%c0_13, %c0_14], %20 {strides = array<i32>} : memref<1x1xf32, #tpu.memory_space<vmem>>, vector<1x1xf32>,
    } else {
    }
    return
  }
  func.func @transform_0(%arg0: i32) -> (i32, i32) {
    %c0_i32 = arith.constant 0 : i32
    %c0_i32_0 = arith.constant 0 : i32
    return %arg0, %c0_i32 : i32, i32
  }
  func.func @transform_1(%arg0: i32) -> (i32, i32) {
    %c0_i32 = arith.constant 0 : i32
    %c0_i32_0 = arith.constant 0 : i32
    return %arg0, %c0_i32 : i32, i32
  }
  func.func @transform_2(%arg0: i32) -> (i32, i32) {
    %c0_i32 = arith.constant 0 : i32
    %c0_i32_0 = arith.constant 0 : i32
    %c0_i32_1 = arith.constant 0 : i32
    return %c0_i32, %c0_i32_0 : i32, i32
  }
}

module attributes {stable_mosaic.version = 11 : i64} {
  func.func @_l1_kernel(%arg0: i32, %arg1: memref<8x128xf32, #tpu.memory_space<vmem>>, %arg2: memref<8x128xf32, #tpu.memory_space<vmem>>, %arg3: memref<1x1xf32, #tpu.memory_space<vmem>>, %arg4: memref<1x1xf32, #tpu.memory_space<vmem>>) attributes {dimension_semantics = [#tpu.dimension_semantics<arbitrary>], iteration_bounds = array<i64: 1>, scalar_prefetch = 0 : i64, scratch_operands = 1 : i64, tpu.core_type = #tpu.core_type<tc>, window_params = [{transform_indices = @transform_0, window_bounds = array<i64: 8, 128>}, {transform_indices = @transform_1, window_bounds = array<i64: 8, 128>}, {pipeline_mode = #tpu.pipeline_mode<synchronous>, transform_indices = @transform_2, window_bounds = array<i64: 1, 1>}]} {
    %c0_i32 = arith.constant 0 : i32
    %0 = arith.cmpi eq, %arg0, %c0_i32 : i32
    %1 = arith.extui %0 : i1 to i32
    %c0_i32_0 = arith.constant 0 : i32
    %2 = arith.cmpi ne, %1, %c0_i32_0 : i32
    scf.if %2 {
      %cst_10 = arith.constant 0.000000e+00 : f32
      %18 = vector.broadcast %cst_10 : f32 to vector<1x1xf32>
      %c0_11 = arith.constant 0 : index
      %c0_12 = arith.constant 0 : index
      %19 = vector.load %arg4[%c0_11, %c0_12] : memref<1x1xf32, #tpu.memory_space<vmem>>, vector<1x1xf32>
      tpu.vector_store %arg4[%c0_11, %c0_12], %18 {strides = array<i32>} : memref<1x1xf32, #tpu.memory_space<vmem>>, vector<1x1xf32>,
    } else {
    }
    %c0 = arith.constant 0 : index
    %c0_1 = arith.constant 0 : index
    %3 = vector.load %arg4[%c0, %c0_1] : memref<1x1xf32, #tpu.memory_space<vmem>>, vector<1x1xf32>
    %c0_2 = arith.constant 0 : index
    %c0_3 = arith.constant 0 : index
    %4 = vector.load %arg1[%c0_2, %c0_3] : memref<8x128xf32, #tpu.memory_space<vmem>>, vector<8x128xf32>
    %c0_4 = arith.constant 0 : index
    %c0_5 = arith.constant 0 : index
    %5 = vector.load %arg2[%c0_4, %c0_5] : memref<8x128xf32, #tpu.memory_space<vmem>>, vector<8x128xf32>
    %6 = arith.subf %4, %5 : vector<8x128xf32>
    %7 = math.absf %6 : vector<8x128xf32>
    %8 = vector.shape_cast %7 : vector<8x128xf32> to vector<1x8x128xf32>
    %cst = arith.constant dense<0.000000e+00> : vector<1xf32>
    %9 = vector.multi_reduction <add>, %8, %cst [1, 2] : vector<1x8x128xf32> to vector<1xf32>
    %10 = vector.shape_cast %9 : vector<1xf32> to vector<1x1x1xf32>
    %11 = vector.extract %10[0, 0, 0] : f32 from vector<1x1x1xf32>
    %12 = vector.broadcast %11 : f32 to vector<1x1xf32>
    %13 = arith.addf %3, %12 : vector<1x1xf32>
    %c0_6 = arith.constant 0 : index
    %c0_7 = arith.constant 0 : index
    %14 = vector.load %arg4[%c0_6, %c0_7] : memref<1x1xf32, #tpu.memory_space<vmem>>, vector<1x1xf32>
    tpu.vector_store %arg4[%c0_6, %c0_7], %13 {strides = array<i32>} : memref<1x1xf32, #tpu.memory_space<vmem>>, vector<1x1xf32>,
    %c0_i32_8 = arith.constant 0 : i32
    %15 = arith.cmpi eq, %arg0, %c0_i32_8 : i32
    %16 = arith.extui %15 : i1 to i32
    %c0_i32_9 = arith.constant 0 : i32
    %17 = arith.cmpi ne, %16, %c0_i32_9 : i32
    scf.if %17 {
      %c0_10 = arith.constant 0 : index
      %c0_11 = arith.constant 0 : index
      %18 = vector.load %arg4[%c0_10, %c0_11] : memref<1x1xf32, #tpu.memory_space<vmem>>, vector<1x1xf32>
      %cst_12 = arith.constant 0.001953125 : f32
      %19 = vector.broadcast %cst_12 : f32 to vector<1x1xf32>
      %20 = arith.mulf %18, %19 : vector<1x1xf32>
      %c0_13 = arith.constant 0 : index
      %c0_14 = arith.constant 0 : index
      %21 = vector.load %arg3[%c0_13, %c0_14] : memref<1x1xf32, #tpu.memory_space<vmem>>, vector<1x1xf32>
      tpu.vector_store %arg3[%c0_13, %c0_14], %20 {strides = array<i32>} : memref<1x1xf32, #tpu.memory_space<vmem>>, vector<1x1xf32>,
    } else {
    }
    return
  }
  func.func @transform_0(%arg0: i32) -> (i32, i32) {
    %c0_i32 = arith.constant 0 : i32
    %c0_i32_0 = arith.constant 0 : i32
    return %arg0, %c0_i32 : i32, i32
  }
  func.func @transform_1(%arg0: i32) -> (i32, i32) {
    %c0_i32 = arith.constant 0 : i32
    %c0_i32_0 = arith.constant 0 : i32
    return %arg0, %c0_i32 : i32, i32
  }
  func.func @transform_2(%arg0: i32) -> (i32, i32) {
    %c0_i32 = arith.constant 0 : i32
    %c0_i32_0 = arith.constant 0 : i32
    %c0_i32_1 = arith.constant 0 : i32
    return %c0_i32, %c0_i32_0 : i32, i32
  }
}

module attributes {stable_mosaic.version = 11 : i64} {
  func.func @_l1_kernel(%arg0: i32, %arg1: memref<8x128xf32, #tpu.memory_space<vmem>>, %arg2: memref<8x128xf32, #tpu.memory_space<vmem>>, %arg3: memref<1x1xf32, #tpu.memory_space<vmem>>, %arg4: memref<1x1xf32, #tpu.memory_space<vmem>>) attributes {dimension_semantics = [#tpu.dimension_semantics<arbitrary>], iteration_bounds = array<i64: 1>, scalar_prefetch = 0 : i64, scratch_operands = 1 : i64, tpu.core_type = #tpu.core_type<tc>, window_params = [{transform_indices = @transform_0, window_bounds = array<i64: 8, 128>}, {transform_indices = @transform_1, window_bounds = array<i64: 8, 128>}, {pipeline_mode = #tpu.pipeline_mode<synchronous>, transform_indices = @transform_2, window_bounds = array<i64: 1, 1>}]} {
    %c0_i32 = arith.constant 0 : i32
    %0 = arith.cmpi eq, %arg0, %c0_i32 : i32
    %1 = arith.extui %0 : i1 to i32
    %c0_i32_0 = arith.constant 0 : i32
    %2 = arith.cmpi ne, %1, %c0_i32_0 : i32
    scf.if %2 {
      %cst_10 = arith.constant 0.000000e+00 : f32
      %18 = vector.broadcast %cst_10 : f32 to vector<1x1xf32>
      %c0_11 = arith.constant 0 : index
      %c0_12 = arith.constant 0 : index
      %19 = vector.load %arg4[%c0_11, %c0_12] : memref<1x1xf32, #tpu.memory_space<vmem>>, vector<1x1xf32>
      tpu.vector_store %arg4[%c0_11, %c0_12], %18 {strides = array<i32>} : memref<1x1xf32, #tpu.memory_space<vmem>>, vector<1x1xf32>,
    } else {
    }
    %c0 = arith.constant 0 : index
    %c0_1 = arith.constant 0 : index
    %3 = vector.load %arg4[%c0, %c0_1] : memref<1x1xf32, #tpu.memory_space<vmem>>, vector<1x1xf32>
    %c0_2 = arith.constant 0 : index
    %c0_3 = arith.constant 0 : index
    %4 = vector.load %arg1[%c0_2, %c0_3] : memref<8x128xf32, #tpu.memory_space<vmem>>, vector<8x128xf32>
    %c0_4 = arith.constant 0 : index
    %c0_5 = arith.constant 0 : index
    %5 = vector.load %arg2[%c0_4, %c0_5] : memref<8x128xf32, #tpu.memory_space<vmem>>, vector<8x128xf32>
    %6 = arith.subf %4, %5 : vector<8x128xf32>
    %7 = math.absf %6 : vector<8x128xf32>
    %8 = vector.shape_cast %7 : vector<8x128xf32> to vector<1x8x128xf32>
    %cst = arith.constant dense<0.000000e+00> : vector<1xf32>
    %9 = vector.multi_reduction <add>, %8, %cst [1, 2] : vector<1x8x128xf32> to vector<1xf32>
    %10 = vector.shape_cast %9 : vector<1xf32> to vector<1x1x1xf32>
    %11 = vector.extract %10[0, 0, 0] : f32 from vector<1x1x1xf32>
    %12 = vector.broadcast %11 : f32 to vector<1x1xf32>
    %13 = arith.addf %3, %12 : vector<1x1xf32>
    %c0_6 = arith.constant 0 : index
    %c0_7 = arith.constant 0 : index
    %14 = vector.load %arg4[%c0_6, %c0_7] : memref<1x1xf32, #tpu.memory_space<vmem>>, vector<1x1xf32>
    tpu.vector_store %arg4[%c0_6, %c0_7], %13 {strides = array<i32>} : memref<1x1xf32, #tpu.memory_space<vmem>>, vector<1x1xf32>,
    %c0_i32_8 = arith.constant 0 : i32
    %15 = arith.cmpi eq, %arg0, %c0_i32_8 : i32
    %16 = arith.extui %15 : i1 to i32
    %c0_i32_9 = arith.constant 0 : i32
    %17 = arith.cmpi ne, %16, %c0_i32_9 : i32
    scf.if %17 {
      %c0_10 = arith.constant 0 : index
      %c0_11 = arith.constant 0 : index
      %18 = vector.load %arg4[%c0_10, %c0_11] : memref<1x1xf32, #tpu.memory_space<vmem>>, vector<1x1xf32>
      %cst_12 = arith.constant 9.765625E-4 : f32
      %19 = vector.broadcast %cst_12 : f32 to vector<1x1xf32>
      %20 = arith.mulf %18, %19 : vector<1x1xf32>
      %c0_13 = arith.constant 0 : index
      %c0_14 = arith.constant 0 : index
      %21 = vector.load %arg3[%c0_13, %c0_14] : memref<1x1xf32, #tpu.memory_space<vmem>>, vector<1x1xf32>
      tpu.vector_store %arg3[%c0_13, %c0_14], %20 {strides = array<i32>} : memref<1x1xf32, #tpu.memory_space<vmem>>, vector<1x1xf32>,
    } else {
    }
    return
  }
  func.func @transform_0(%arg0: i32) -> (i32, i32) {
    %c0_i32 = arith.constant 0 : i32
    %c0_i32_0 = arith.constant 0 : i32
    return %arg0, %c0_i32 : i32, i32
  }
  func.func @transform_1(%arg0: i32) -> (i32, i32) {
    %c0_i32 = arith.constant 0 : i32
    %c0_i32_0 = arith.constant 0 : i32
    return %arg0, %c0_i32 : i32, i32
  }
  func.func @transform_2(%arg0: i32) -> (i32, i32) {
    %c0_i32 = arith.constant 0 : i32
    %c0_i32_0 = arith.constant 0 : i32
    %c0_i32_1 = arith.constant 0 : i32
    return %c0_i32, %c0_i32_0 : i32, i32
  }
}

</mosaic_0001>

<llo_original>
// kernel: perceptual_loss.10
$region0: #{perceptual_loss.10}
  #allocation0 [shape = 'u32[]', space=smem, size = 0x4, offset = 0x4, fixed_abs, tag = 'smem constant byte address 0x4 - core index']
  #allocation1 [shape = 'u32[144,128]{1,0:T(1,128)}', space=vmem, size = 0x12000, scoped, tag = 'internal scratch']
  %s0 = inlined_call_operand.vmem [shape: bf16[256,27], index: 0, kind: input, shape index: {}]
  %s1 = inlined_call_operand.vmem [shape: bf16[27,8], index: 1, kind: input, shape index: {}]
  %s2 = inlined_call_operand.vmem [shape: f32[1,8], index: 2, kind: input, shape index: {}]
  %s3 = inlined_call_operand.vmem [shape: f32[256,8], index: 3, kind: output, shape index: {}]
  %s4 = sld [smem:[#allocation0]]
  $region22: #{perceptual_loss.10} parent=0
    _
  %s6 = ssub.s32 1, %s4
  %s7 = scalar_select 0, %s6, %s4
  // Predicated region
  $region2: #{perceptual_loss.10} parent=0 // pred_check
    _
  $region3: #{perceptual_loss.10} parent=0 // pred_check_branch
    %9 = sbr.rel (0) target = $region5
  $region4: #{perceptual_loss.10} parent=0 // pred_region
    _
  $region5: #{perceptual_loss.10} parent=0 // pred_fallthru
    _
  // Predicated region
  $region6: #{perceptual_loss.10} parent=0 // pred_check
    _
  $region7: #{perceptual_loss.10} parent=0 // pred_check_branch
    %11 = sbr.rel (0) target = $region9
  $region8: #{perceptual_loss.10} parent=0 // pred_region
    _
  $region9: #{perceptual_loss.10} parent=0 // pred_fallthru
    _
  // Predicated region
  $region10: #{perceptual_loss.10} parent=0 // pred_check
    _
  $region11: #{perceptual_loss.10} parent=0 // pred_check_branch
    %13 = sbr.rel (0) target = $region13
  $region12: #{perceptual_loss.10} parent=0 // pred_region
    _
  $region13: #{perceptual_loss.10} parent=0 // pred_fallthru
    _
  %v15 = vld [vmem:[%s0] sm:$0xf]
  %v16 = vld [vmem:[%s0 + $0x4] sm:$0xf]
  %v17 = vld [vmem:[%s0 + $0x8] sm:$0xf]
  %v18 = vld [vmem:[%s0 + $0xc] sm:$0xf]
  %v19 = vld [vmem:[%s0 + $0x10] sm:$0xf]
  %v20 = vld [vmem:[%s0 + $0x14] sm:$0xf]
  %v21 = vld [vmem:[%s0 + $0x18] sm:$0xf]
  %v22 = vld [vmem:[%s0 + $0x1c] sm:$0xf]
  %v23 = vld [vmem:[%s0 + $0x20] sm:$0xf]
  %v24 = vld [vmem:[%s0 + $0x24] sm:$0xf]
  %v25 = vld [vmem:[%s0 + $0x28] sm:$0xf]
  %v26 = vld [vmem:[%s0 + $0x2c] sm:$0xf]
  %v27 = vld [vmem:[%s0 + $0x30] sm:$0xf]
  %v28 = vld [vmem:[%s0 + $0x34] sm:$0xf]
  %v29 = vld [vmem:[%s0 + $0x38] sm:$0xf]
  %v30 = vld [vmem:[%s0 + $0x3c] sm:$0xf]
  %v31 = vld [vmem:[%s0 + $0x40] sm:$0xf]
  %v32 = vld [vmem:[%s0 + $0x44] sm:$0xf]
  %v33 = vld [vmem:[%s0 + $0x48] sm:$0xf]
  %v34 = vld [vmem:[%s0 + $0x4c] sm:$0xf]
  %v35 = vld [vmem:[%s0 + $0x50] sm:$0xf]
  %v36 = vld [vmem:[%s0 + $0x54] sm:$0xf]
  %v37 = vld [vmem:[%s0 + $0x58] sm:$0xf]
  %v38 = vld [vmem:[%s0 + $0x5c] sm:$0xf]
  %v39 = vld [vmem:[%s0 + $0x60] sm:$0xf]
  %v40 = vld [vmem:[%s0 + $0x64] sm:$0xf]
  %v41 = vld [vmem:[%s0 + $0x68] sm:$0xf]
  %v42 = vld [vmem:[%s0 + $0x6c] sm:$0xf]
  %v43 = vld [vmem:[%s0 + $0x70] sm:$0xf]
  %v44 = vld [vmem:[%s0 + $0x74] sm:$0xf]
  %v45 = vld [vmem:[%s0 + $0x78] sm:$0xf]
  %v46 = vld [vmem:[%s0 + $0x7c] sm:$0xf]
  %v47 = vld [vmem:[%s1] sm:$0xf]
  %v48 = vld [vmem:[%s1 + $0x4] sm:$0xf]
  %v49 = vld [vmem:[%s1 + $0x8] sm:$0xf]
  %v50 = vld [vmem:[%s1 + $0xc] sm:$0x3]
  %v51 = vld [vmem:[%s2] sm:$0x1]
  %v53 = vlaneseq
  %v54 = vshrl.u32 %v53, 7
  %v55 = vsub.s32 0, %v54
  %v56 = vrot.slane %v51, %v55
  %v90 = vunpack.c.l.b16 %v15
  %v91 = vunpack.c.l.b16 %v16
  %v92 = vunpack.c.l.b16 %v17
  %v93 = vunpack.c.l.b16 %v18
  %v94 = vunpack.c.l.b16 %v19
  %v95 = vunpack.c.l.b16 %v20
  %v96 = vunpack.c.l.b16 %v21
  %v97 = vunpack.c.l.b16 %v22
  %v98 = vunpack.c.l.b16 %v23
  %v99 = vunpack.c.l.b16 %v24
  %v100 = vunpack.c.l.b16 %v25
  %v101 = vunpack.c.l.b16 %v26
  %v102 = vunpack.c.l.b16 %v27
  %v103 = vunpack.c.l.b16 %v28
  %v104 = vunpack.c.l.b16 %v29
  %v105 = vunpack.c.l.b16 %v30
  %v106 = vunpack.c.l.b16 %v31
  %v107 = vunpack.c.l.b16 %v32
  %v108 = vunpack.c.l.b16 %v33
  %v109 = vunpack.c.l.b16 %v34
  %v110 = vunpack.c.l.b16 %v35
  %v111 = vunpack.c.l.b16 %v36
  %v112 = vunpack.c.l.b16 %v37
  %v113 = vunpack.c.l.b16 %v38
  %v114 = vunpack.c.l.b16 %v39
  %v115 = vunpack.c.l.b16 %v40
  %v116 = vunpack.c.l.b16 %v41
  %v117 = vunpack.c.l.b16 %v42
  %v118 = vunpack.c.l.b16 %v43
  %v119 = vunpack.c.l.b16 %v44
  %v120 = vunpack.c.l.b16 %v45
  %v121 = vunpack.c.l.b16 %v46
  %v122 = vpack.c.b16 %v91, %v90
  %v123 = vpack.c.b16 %v93, %v92
  %v124 = vpack.c.b16 %v95, %v94
  %v125 = vpack.c.b16 %v97, %v96
  %v126 = vpack.c.b16 %v99, %v98
  %v127 = vpack.c.b16 %v101, %v100
  %v128 = vpack.c.b16 %v103, %v102
  %v129 = vpack.c.b16 %v105, %v104
  %v130 = vpack.c.b16 %v107, %v106
  %v131 = vpack.c.b16 %v109, %v108
  %v132 = vpack.c.b16 %v111, %v110
  %v133 = vpack.c.b16 %v113, %v112
  %v134 = vpack.c.b16 %v115, %v114
  %v135 = vpack.c.b16 %v117, %v116
  %v136 = vpack.c.b16 %v119, %v118
  %v137 = vpack.c.b16 %v121, %v120
  %v142 = vunpack.c.l.b16 %v47
  %v143 = vunpack.c.l.b16 %v48
  %v144 = vunpack.c.l.b16 %v49
  %v145 = vunpack.c.l.b16 %v50
  %v146 = vpack.c.b16 %v143, %v142
  %v147 = vpack.c.b16 %v145, %v144
  %vm149 = vcmask 220160
  %v151 = vsel %vm149, %v122, 0
  %v154 = vsel %vm149, %v123, 0
  %v157 = vsel %vm149, %v124, 0
  %v160 = vsel %vm149, %v125, 0
  %v163 = vsel %vm149, %v126, 0
  %v166 = vsel %vm149, %v127, 0
  %v169 = vsel %vm149, %v128, 0
  %v172 = vsel %vm149, %v129, 0
  %v175 = vsel %vm149, %v130, 0
  %v178 = vsel %vm149, %v131, 0
  %v181 = vsel %vm149, %v132, 0
  %v184 = vsel %vm149, %v133, 0
  %v187 = vsel %vm149, %v134, 0
  %v190 = vsel %vm149, %v135, 0
  %v193 = vsel %vm149, %v136, 0
  %v196 = vsel %vm149, %v137, 0
  %vm198 = vcmask 1044480
  %vm199 = vcmask 1045504
  %v200 = vsel %vm198, 4294967295, 65535
  %v201 = vsel %vm199, %v200, 0
  %v203 = vand.u32 %v147, %v201
  %205 = vmatprep.subr.bf16.mxu0 0
  %206 = vmatpush1.bf16.msra.mxu0 %v146
  %207 = vmatprep.subr.bf16.mxu0 0
  %208 = vmatpush1.bf16.msra.mxu0 %v203
  %209 = vmatprep.subr.bf16.mxu0 0
  %210 = vmatpush1.bf16.msra.mxu0 0
  %211 = vmatprep.subr.bf16.mxu0 0
  %212 = vmatpush1.bf16.msra.mxu0 0
  %213 = vmatprep.subr.bf16.mxu0 0
  %214 = vmatpush1.bf16.msra.mxu0 0
  %215 = vmatprep.subr.bf16.mxu0 0
  %216 = vmatpush1.bf16.msra.mxu0 0
  %217 = vmatprep.subr.bf16.mxu0 0
  %218 = vmatpush1.bf16.msra.mxu0 0
  %219 = vmatprep.subr.bf16.mxu0 0
  %220 = vmatpush1.bf16.msra.mxu0 0
  %221 = vmatprep.subr.bf16.mxu0 0
  %222 = vmatpush1.bf16.msra.mxu0 0
  %223 = vmatprep.subr.bf16.mxu0 0
  %224 = vmatpush1.bf16.msra.mxu0 0
  %225 = vmatprep.subr.bf16.mxu0 0
  %226 = vmatpush1.bf16.msra.mxu0 0
  %227 = vmatprep.subr.bf16.mxu0 0
  %228 = vmatpush1.bf16.msra.mxu0 0
  %229 = vmatprep.subr.bf16.mxu0 0
  %230 = vmatpush1.bf16.msra.mxu0 0
  %231 = vmatprep.subr.bf16.mxu0 0
  %232 = vmatpush1.bf16.msra.mxu0 0
  %233 = vmatprep.subr.bf16.mxu0 0
  %234 = vmatpush1.bf16.msra.mxu0 0
  %235 = vmatprep.subr.bf16.mxu0 0
  %236 = vmatpush1.bf16.msra.mxu0 0
  %237 = vmatprep.mubr.bf16.mxu0 0
  %238 = vmatmul.mubr.bf16.gmra.mrb[0].mxu0 %v151
  %v239 = vpop.f32.mrb[0].mxu0
  %v240 = vadd.f32 %v56, %v239
  %v241 = vpop.f32.mrb[0].mxu0
  %v242 = vpop.f32.mrb[0].mxu0
  %v243 = vadd.f32 %v56, %v242
  %v244 = vpop.f32.mrb[0].mxu0
  %245 = vmatprep.mubr.bf16.mxu0 0
  %246 = vmatmul.mubr.bf16.gmra.mrb[0].mxu0 %v154
  %v247 = vpop.f32.mrb[0].mxu0
  %v248 = vadd.f32 %v56, %v247
  %v249 = vpop.f32.mrb[0].mxu0
  %v250 = vpop.f32.mrb[0].mxu0
  %v251 = vadd.f32 %v56, %v250
  %v252 = vpop.f32.mrb[0].mxu0
  %253 = vmatprep.mubr.bf16.mxu0 0
  %254 = vmatmul.mubr.bf16.gmra.mrb[0].mxu0 %v157
  %v255 = vpop.f32.mrb[0].mxu0
  %v256 = vadd.f32 %v56, %v255
  %v257 = vpop.f32.mrb[0].mxu0
  %v258 = vpop.f32.mrb[0].mxu0
  %v259 = vadd.f32 %v56, %v258
  %v260 = vpop.f32.mrb[0].mxu0
  %261 = vmatprep.mubr.bf16.mxu0 0
  %262 = vmatmul.mubr.bf16.gmra.mrb[0].mxu0 %v160
  %v263 = vpop.f32.mrb[0].mxu0
  %v264 = vadd.f32 %v56, %v263
  %v265 = vpop.f32.mrb[0].mxu0
  %v266 = vpop.f32.mrb[0].mxu0
  %v267 = vadd.f32 %v56, %v266
  %v268 = vpop.f32.mrb[0].mxu0
  %269 = vmatprep.mubr.bf16.mxu0 0
  %270 = vmatmul.mubr.bf16.gmra.mrb[0].mxu0 %v163
  %v271 = vpop.f32.mrb[0].mxu0
  %v272 = vadd.f32 %v56, %v271
  %v273 = vpop.f32.mrb[0].mxu0
  %v274 = vpop.f32.mrb[0].mxu0
  %v275 = vadd.f32 %v56, %v274
  %v276 = vpop.f32.mrb[0].mxu0
  %277 = vmatprep.mubr.bf16.mxu0 0
  %278 = vmatmul.mubr.bf16.gmra.mrb[0].mxu0 %v166
  %v279 = vpop.f32.mrb[0].mxu0
  %v280 = vadd.f32 %v56, %v279
  %v281 = vpop.f32.mrb[0].mxu0
  %v282 = vpop.f32.mrb[0].mxu0
  %v283 = vadd.f32 %v56, %v282
  %v284 = vpop.f32.mrb[0].mxu0
  %285 = vmatprep.mubr.bf16.mxu0 0
  %286 = vmatmul.mubr.bf16.gmra.mrb[0].mxu0 %v169
  %v287 = vpop.f32.mrb[0].mxu0
  %v288 = vadd.f32 %v56, %v287
  %v289 = vpop.f32.mrb[0].mxu0
  %v290 = vpop.f32.mrb[0].mxu0
  %v291 = vadd.f32 %v56, %v290
  %v292 = vpop.f32.mrb[0].mxu0
  %293 = vmatprep.mubr.bf16.mxu0 0
  %294 = vmatmul.mubr.bf16.gmra.mrb[0].mxu0 %v172
  %v295 = vpop.f32.mrb[0].mxu0
  %v296 = vadd.f32 %v56, %v295
  %v297 = vpop.f32.mrb[0].mxu0
  %v298 = vpop.f32.mrb[0].mxu0
  %v299 = vadd.f32 %v56, %v298
  %v300 = vpop.f32.mrb[0].mxu0
  %301 = vmatprep.mubr.bf16.mxu0 0
  %302 = vmatmul.mubr.bf16.gmra.mrb[0].mxu0 %v175
  %v303 = vpop.f32.mrb[0].mxu0
  %v304 = vadd.f32 %v56, %v303
  %v305 = vpop.f32.mrb[0].mxu0
  %v306 = vpop.f32.mrb[0].mxu0
  %v307 = vadd.f32 %v56, %v306
  %v308 = vpop.f32.mrb[0].mxu0
  %309 = vmatprep.mubr.bf16.mxu0 0
  %310 = vmatmul.mubr.bf16.gmra.mrb[0].mxu0 %v178
  %v311 = vpop.f32.mrb[0].mxu0
  %v312 = vadd.f32 %v56, %v311
  %v313 = vpop.f32.mrb[0].mxu0
  %v314 = vpop.f32.mrb[0].mxu0
  %v315 = vadd.f32 %v56, %v314
  %v316 = vpop.f32.mrb[0].mxu0
  %317 = vmatprep.mubr.bf16.mxu0 0
  %318 = vmatmul.mubr.bf16.gmra.mrb[0].mxu0 %v181
  %v319 = vpop.f32.mrb[0].mxu0
  %v320 = vadd.f32 %v56, %v319
  %v321 = vpop.f32.mrb[0].mxu0
  %v322 = vpop.f32.mrb[0].mxu0
  %v323 = vadd.f32 %v56, %v322
  %v324 = vpop.f32.mrb[0].mxu0
  %325 = vmatprep.mubr.bf16.mxu0 0
  %326 = vmatmul.mubr.bf16.gmra.mrb[0].mxu0 %v184
  %v327 = vpop.f32.mrb[0].mxu0
  %v328 = vadd.f32 %v56, %v327
  %v329 = vpop.f32.mrb[0].mxu0
  %v330 = vpop.f32.mrb[0].mxu0
  %v331 = vadd.f32 %v56, %v330
  %v332 = vpop.f32.mrb[0].mxu0
  %333 = vmatprep.mubr.bf16.mxu0 0
  %334 = vmatmul.mubr.bf16.gmra.mrb[0].mxu0 %v187
  %v335 = vpop.f32.mrb[0].mxu0
  %v336 = vadd.f32 %v56, %v335
  %v337 = vpop.f32.mrb[0].mxu0
  %v338 = vpop.f32.mrb[0].mxu0
  %v339 = vadd.f32 %v56, %v338
  %v340 = vpop.f32.mrb[0].mxu0
  %341 = vmatprep.mubr.bf16.mxu0 0
  %342 = vmatmul.mubr.bf16.gmra.mrb[0].mxu0 %v190
  %v343 = vpop.f32.mrb[0].mxu0
  %v344 = vadd.f32 %v56, %v343
  %v345 = vpop.f32.mrb[0].mxu0
  %v346 = vpop.f32.mrb[0].mxu0
  %v347 = vadd.f32 %v56, %v346
  %v348 = vpop.f32.mrb[0].mxu0
  %349 = vmatprep.mubr.bf16.mxu0 0
  %350 = vmatmul.mubr.bf16.gmra.mrb[0].mxu0 %v193
  %v351 = vpop.f32.mrb[0].mxu0
  %v352 = vadd.f32 %v56, %v351
  %v353 = vpop.f32.mrb[0].mxu0
  %v354 = vpop.f32.mrb[0].mxu0
  %v355 = vadd.f32 %v56, %v354
  %v356 = vpop.f32.mrb[0].mxu0
  %357 = vmatprep.mubr.bf16.mxu0 0
  %358 = vmatmul.mubr.bf16.gmra.mrb[0].mxu0 %v196
  %v359 = vpop.f32.mrb[0].mxu0
  %v360 = vadd.f32 %v56, %v359
  %v361 = vpop.f32.mrb[0].mxu0
  %v362 = vpop.f32.mrb[0].mxu0
  %v363 = vadd.f32 %v56, %v362
  %v364 = vpop.f32.mrb[0].mxu0
  %365 = vdwg.mxu0
  %v366 = vmax.f32 %v240, 0.0
  %v367 = vmax.f32 %v243, 0.0
  %v368 = vmax.f32 %v248, 0.0
  %v369 = vmax.f32 %v251, 0.0
  %v370 = vmax.f32 %v256, 0.0
  %v371 = vmax.f32 %v259, 0.0
  %v372 = vmax.f32 %v264, 0.0
  %v373 = vmax.f32 %v267, 0.0
  %v374 = vmax.f32 %v272, 0.0
  %v375 = vmax.f32 %v275, 0.0
  %v376 = vmax.f32 %v280, 0.0
  %v377 = vmax.f32 %v283, 0.0
  %v378 = vmax.f32 %v288, 0.0
  %v379 = vmax.f32 %v291, 0.0
  %v380 = vmax.f32 %v296, 0.0
  %v381 = vmax.f32 %v299, 0.0
  %v382 = vmax.f32 %v304, 0.0
  %v383 = vmax.f32 %v307, 0.0
  %v384 = vmax.f32 %v312, 0.0
  %v385 = vmax.f32 %v315, 0.0
  %v386 = vmax.f32 %v320, 0.0
  %v387 = vmax.f32 %v323, 0.0
  %v388 = vmax.f32 %v328, 0.0
  %v389 = vmax.f32 %v331, 0.0
  %v390 = vmax.f32 %v336, 0.0
  %v391 = vmax.f32 %v339, 0.0
  %v392 = vmax.f32 %v344, 0.0
  %v393 = vmax.f32 %v347, 0.0
  %v394 = vmax.f32 %v352, 0.0
  %v395 = vmax.f32 %v355, 0.0
  %v396 = vmax.f32 %v360, 0.0
  %v397 = vmax.f32 %v363, 0.0
  %vm398 = vcmask 64512
  %399 = vst.msk [vmem:[%s3] sm:$0xff] %vm398, %v366
  %400 = vst.msk [vmem:[%s3 + $0x8] sm:$0xff] %vm398, %v367
  %401 = vst.msk [vmem:[%s3 + $0x10] sm:$0xff] %vm398, %v368
  %402 = vst.msk [vmem:[%s3 + $0x18] sm:$0xff] %vm398, %v369
  %403 = vst.msk [vmem:[%s3 + $0x20] sm:$0xff] %vm398, %v370
  %404 = vst.msk [vmem:[%s3 + $0x28] sm:$0xff] %vm398, %v371
  %405 = vst.msk [vmem:[%s3 + $0x30] sm:$0xff] %vm398, %v372
  %406 = vst.msk [vmem:[%s3 + $0x38] sm:$0xff] %vm398, %v373
  %407 = vst.msk [vmem:[%s3 + $0x40] sm:$0xff] %vm398, %v374
  %408 = vst.msk [vmem:[%s3 + $0x48] sm:$0xff] %vm398, %v375
  %409 = vst.msk [vmem:[%s3 + $0x50] sm:$0xff] %vm398, %v376
  %410 = vst.msk [vmem:[%s3 + $0x58] sm:$0xff] %vm398, %v377
  %411 = vst.msk [vmem:[%s3 + $0x60] sm:$0xff] %vm398, %v378
  %412 = vst.msk [vmem:[%s3 + $0x68] sm:$0xff] %vm398, %v379
  %413 = vst.msk [vmem:[%s3 + $0x70] sm:$0xff] %vm398, %v380
  %414 = vst.msk [vmem:[%s3 + $0x78] sm:$0xff] %vm398, %v381
  %415 = vst.msk [vmem:[%s3 + $0x80] sm:$0xff] %vm398, %v382
  %416 = vst.msk [vmem:[%s3 + $0x88] sm:$0xff] %vm398, %v383
  %417 = vst.msk [vmem:[%s3 + $0x90] sm:$0xff] %vm398, %v384
  %418 = vst.msk [vmem:[%s3 + $0x98] sm:$0xff] %vm398, %v385
  %419 = vst.msk [vmem:[%s3 + $0xa0] sm:$0xff] %vm398, %v386
  %420 = vst.msk [vmem:[%s3 + $0xa8] sm:$0xff] %vm398, %v387
  %421 = vst.msk [vmem:[%s3 + $0xb0] sm:$0xff] %vm398, %v388
  %422 = vst.msk [vmem:[%s3 + $0xb8] sm:$0xff] %vm398, %v389
  %423 = vst.msk [vmem:[%s3 + $0xc0] sm:$0xff] %vm398, %v390
  %424 = vst.msk [vmem:[%s3 + $0xc8] sm:$0xff] %vm398, %v391
  %425 = vst.msk [vmem:[%s3 + $0xd0] sm:$0xff] %vm398, %v392
  %426 = vst.msk [vmem:[%s3 + $0xd8] sm:$0xff] %vm398, %v393
  %427 = vst.msk [vmem:[%s3 + $0xe0] sm:$0xff] %vm398, %v394
  %428 = vst.msk [vmem:[%s3 + $0xe8] sm:$0xff] %vm398, %v395
  %429 = vst.msk [vmem:[%s3 + $0xf0] sm:$0xff] %vm398, %v396
  %430 = vst.msk [vmem:[%s3 + $0xf8] sm:$0xff] %vm398, %v397
  // Predicated region
  $region14: #{perceptual_loss.10} parent=0 // pred_check
    _
  $region15: #{perceptual_loss.10} parent=0 // pred_check_branch
    %432 = sbr.rel (0) target = $region17
  $region16: #{perceptual_loss.10} parent=0 // pred_region
    _
  $region17: #{perceptual_loss.10} parent=0 // pred_fallthru
    _
  // Predicated region
  $region18: #{perceptual_loss.10} parent=0 // pred_check
    _
  $region19: #{perceptual_loss.10} parent=0 // pred_check_branch
    %434 = sbr.rel (0) target = $region21
  $region20: #{perceptual_loss.10} parent=0 // pred_region
    _
  $region21: #{perceptual_loss.10} parent=0 // pred_fallthru
    _

// kernel: perceptual_loss.14
$region0: #{perceptual_loss.14}
  #allocation0 [shape = 'u32[]', space=smem, size = 0x4, offset = 0x4, fixed_abs, tag = 'smem constant byte address 0x4 - core index']
  #allocation1 [shape = 'u32[144,128]{1,0:T(1,128)}', space=vmem, size = 0x12000, scoped, tag = 'internal scratch']
  %s0 = inlined_call_operand.vmem [shape: bf16[16,72], index: 0, kind: input, shape index: {}]
  %s1 = inlined_call_operand.vmem [shape: bf16[72,32], index: 1, kind: input, shape index: {}]
  %s2 = inlined_call_operand.vmem [shape: f32[1,32], index: 2, kind: input, shape index: {}]
  %s3 = inlined_call_operand.vmem [shape: f32[16,32], index: 3, kind: output, shape index: {}]
  %s4 = sld [smem:[#allocation0]]
  $region22: #{perceptual_loss.14} parent=0
    _
  %s6 = ssub.s32 1, %s4
  %s7 = scalar_select 0, %s6, %s4
  // Predicated region
  $region2: #{perceptual_loss.14} parent=0 // pred_check
    _
  $region3: #{perceptual_loss.14} parent=0 // pred_check_branch
    %9 = sbr.rel (0) target = $region5
  $region4: #{perceptual_loss.14} parent=0 // pred_region
    _
  $region5: #{perceptual_loss.14} parent=0 // pred_fallthru
    _
  // Predicated region
  $region6: #{perceptual_loss.14} parent=0 // pred_check
    _
  $region7: #{perceptual_loss.14} parent=0 // pred_check_branch
    %11 = sbr.rel (0) target = $region9
  $region8: #{perceptual_loss.14} parent=0 // pred_region
    _
  $region9: #{perceptual_loss.14} parent=0 // pred_fallthru
    _
  // Predicated region
  $region10: #{perceptual_loss.14} parent=0 // pred_check
    _
  $region11: #{perceptual_loss.14} parent=0 // pred_check_branch
    %13 = sbr.rel (0) target = $region13
  $region12: #{perceptual_loss.14} parent=0 // pred_region
    _
  $region13: #{perceptual_loss.14} parent=0 // pred_fallthru
    _
  %v15 = vld [vmem:[%s0] sm:$0xf]
  %v16 = vld [vmem:[%s0 + $0x4] sm:$0xf]
  %v17 = vld [vmem:[%s1] sm:$0xf]
  %v18 = vld [vmem:[%s1 + $0x4] sm:$0xf]
  %v19 = vld [vmem:[%s1 + $0x8] sm:$0xf]
  %v20 = vld [vmem:[%s1 + $0xc] sm:$0xf]
  %v21 = vld [vmem:[%s1 + $0x10] sm:$0xf]
  %v22 = vld [vmem:[%s1 + $0x14] sm:$0xf]
  %v23 = vld [vmem:[%s1 + $0x18] sm:$0xf]
  %v24 = vld [vmem:[%s1 + $0x1c] sm:$0xf]
  %v25 = vld [vmem:[%s1 + $0x20] sm:$0xf]
  %v26 = vld [vmem:[%s2] sm:$0x1]
  %v28 = vlaneseq
  %v29 = vshrl.u32 %v28, 7
  %v30 = vsub.s32 0, %v29
  %v31 = vrot.slane %v26, %v30
  %v35 = vunpack.c.l.b16 %v15
  %v36 = vunpack.c.l.b16 %v16
  %v37 = vpack.c.b16 %v36, %v35
  %v47 = vunpack.c.l.b16 %v17
  %v48 = vunpack.c.l.b16 %v18
  %v49 = vunpack.c.l.b16 %v19
  %v50 = vunpack.c.l.b16 %v20
  %v51 = vunpack.c.l.b16 %v21
  %v52 = vunpack.c.l.b16 %v22
  %v53 = vunpack.c.l.b16 %v23
  %v54 = vunpack.c.l.b16 %v24
  %v55 = vunpack.c.l.b16 %v25
  %v56 = vpack.c.b16 %v48, %v47
  %v57 = vpack.c.b16 %v50, %v49
  %v58 = vpack.c.b16 %v52, %v51
  %v59 = vpack.c.b16 %v54, %v53
  %v60 = vpack.c.b16 %v55, %v55
  %vm65 = vcmask 588800
  %v67 = vsel %vm65, %v37, 0
  %vm69 = vcmask 1043456
  %v71 = vsel %vm69, %v60, 0
  %73 = vmatprep.subr.bf16.mxu0 0
  %74 = vmatpush1.bf16.msra.mxu0 %v56
  %75 = vmatprep.subr.bf16.mxu0 0
  %76 = vmatpush1.bf16.msra.mxu0 %v57
  %77 = vmatprep.subr.bf16.mxu0 0
  %78 = vmatpush1.bf16.msra.mxu0 %v58
  %79 = vmatprep.subr.bf16.mxu0 0
  %80 = vmatpush1.bf16.msra.mxu0 %v59
  %81 = vmatprep.subr.bf16.mxu0 0
  %82 = vmatpush1.bf16.msra.mxu0 %v71
  %83 = vmatprep.subr.bf16.mxu0 0
  %84 = vmatpush1.bf16.msra.mxu0 0
  %85 = vmatprep.subr.bf16.mxu0 0
  %86 = vmatpush1.bf16.msra.mxu0 0
  %87 = vmatprep.subr.bf16.mxu0 0
  %88 = vmatpush1.bf16.msra.mxu0 0
  %89 = vmatprep.subr.bf16.mxu0 0
  %90 = vmatpush1.bf16.msra.mxu0 0
  %91 = vmatprep.subr.bf16.mxu0 0
  %92 = vmatpush1.bf16.msra.mxu0 0
  %93 = vmatprep.subr.bf16.mxu0 0
  %94 = vmatpush1.bf16.msra.mxu0 0
  %95 = vmatprep.subr.bf16.mxu0 0
  %96 = vmatpush1.bf16.msra.mxu0 0
  %97 = vmatprep.subr.bf16.mxu0 0
  %98 = vmatpush1.bf16.msra.mxu0 0
  %99 = vmatprep.subr.bf16.mxu0 0
  %100 = vmatpush1.bf16.msra.mxu0 0
  %101 = vmatprep.subr.bf16.mxu0 0
  %102 = vmatpush1.bf16.msra.mxu0 0
  %103 = vmatprep.subr.bf16.mxu0 0
  %104 = vmatpush1.bf16.msra.mxu0 0
  %105 = vmatprep.mubr.bf16.mxu0 0
  %106 = vmatmul.mubr.bf16.gmra.mrb[0].mxu0 %v67
  %v107 = vpop.f32.mrb[0].mxu0
  %v108 = vadd.f32 %v31, %v107
  %v109 = vpop.f32.mrb[0].mxu0
  %v110 = vpop.f32.mrb[0].mxu0
  %v111 = vadd.f32 %v31, %v110
  %v112 = vpop.f32.mrb[0].mxu0
  %113 = vdwg.mxu0
  %vm114 = vcmask 261120
  %115 = vst.msk [vmem:[%s3] sm:$0xff] %vm114, %v108
  %116 = vst.msk [vmem:[%s3 + $0x8] sm:$0xff] %vm114, %v111
  // Predicated region
  $region14: #{perceptual_loss.14} parent=0 // pred_check
    _
  $region15: #{perceptual_loss.14} parent=0 // pred_check_branch
    %118 = sbr.rel (0) target = $region17
  $region16: #{perceptual_loss.14} parent=0 // pred_region
    _
  $region17: #{perceptual_loss.14} parent=0 // pred_fallthru
    _
  // Predicated region
  $region18: #{perceptual_loss.14} parent=0 // pred_check
    _
  $region19: #{perceptual_loss.14} parent=0 // pred_check_branch
    %120 = sbr.rel (0) target = $region21
  $region20: #{perceptual_loss.14} parent=0 // pred_region
    _
  $region21: #{perceptual_loss.14} parent=0 // pred_fallthru
    _

// kernel: perceptual_loss.11
$region0: #{perceptual_loss.11}
  #allocation0 [shape = 'u32[]', space=smem, size = 0x4, offset = 0x4, fixed_abs, tag = 'smem constant byte address 0x4 - core index']
  #allocation1 [shape = 'u32[144,128]{1,0:T(1,128)}', space=vmem, size = 0x12000, scoped, tag = 'internal scratch']
  %s0 = inlined_call_operand.vmem [shape: bf16[64,72], index: 0, kind: input, shape index: {}]
  %s1 = inlined_call_operand.vmem [shape: bf16[72,16], index: 1, kind: input, shape index: {}]
  %s2 = inlined_call_operand.vmem [shape: f32[1,16], index: 2, kind: input, shape index: {}]
  %s3 = inlined_call_operand.vmem [shape: f32[64,16], index: 3, kind: output, shape index: {}]
  %s4 = sld [smem:[#allocation0]]
  $region22: #{perceptual_loss.11} parent=0
    _
  %s6 = ssub.s32 1, %s4
  %s7 = scalar_select 0, %s6, %s4
  // Predicated region
  $region2: #{perceptual_loss.11} parent=0 // pred_check
    _
  $region3: #{perceptual_loss.11} parent=0 // pred_check_branch
    %9 = sbr.rel (0) target = $region5
  $region4: #{perceptual_loss.11} parent=0 // pred_region
    _
  $region5: #{perceptual_loss.11} parent=0 // pred_fallthru
    _
  // Predicated region
  $region6: #{perceptual_loss.11} parent=0 // pred_check
    _
  $region7: #{perceptual_loss.11} parent=0 // pred_check_branch
    %11 = sbr.rel (0) target = $region9
  $region8: #{perceptual_loss.11} parent=0 // pred_region
    _
  $region9: #{perceptual_loss.11} parent=0 // pred_fallthru
    _
  // Predicated region
  $region10: #{perceptual_loss.11} parent=0 // pred_check
    _
  $region11: #{perceptual_loss.11} parent=0 // pred_check_branch
    %13 = sbr.rel (0) target = $region13
  $region12: #{perceptual_loss.11} parent=0 // pred_region
    _
  $region13: #{perceptual_loss.11} parent=0 // pred_fallthru
    _
  %v15 = vld [vmem:[%s0] sm:$0xf]
  %v16 = vld [vmem:[%s0 + $0x4] sm:$0xf]
  %v17 = vld [vmem:[%s0 + $0x8] sm:$0xf]
  %v18 = vld [vmem:[%s0 + $0xc] sm:$0xf]
  %v19 = vld [vmem:[%s0 + $0x10] sm:$0xf]
  %v20 = vld [vmem:[%s0 + $0x14] sm:$0xf]
  %v21 = vld [vmem:[%s0 + $0x18] sm:$0xf]
  %v22 = vld [vmem:[%s0 + $0x1c] sm:$0xf]
  %v23 = vld [vmem:[%s1] sm:$0xf]
  %v24 = vld [vmem:[%s1 + $0x4] sm:$0xf]
  %v25 = vld [vmem:[%s1 + $0x8] sm:$0xf]
  %v26 = vld [vmem:[%s1 + $0xc] sm:$0xf]
  %v27 = vld [vmem:[%s1 + $0x10] sm:$0xf]
  %v28 = vld [vmem:[%s1 + $0x14] sm:$0xf]
  %v29 = vld [vmem:[%s1 + $0x18] sm:$0xf]
  %v30 = vld [vmem:[%s1 + $0x1c] sm:$0xf]
  %v31 = vld [vmem:[%s1 + $0x20] sm:$0xf]
  %v32 = vld [vmem:[%s2] sm:$0x1]
  %v34 = vlaneseq
  %v35 = vshrl.u32 %v34, 7
  %v36 = vsub.s32 0, %v35
  %v37 = vrot.slane %v32, %v36
  %v47 = vunpack.c.l.b16 %v15
  %v48 = vunpack.c.l.b16 %v16
  %v49 = vunpack.c.l.b16 %v17
  %v50 = vunpack.c.l.b16 %v18
  %v51 = vunpack.c.l.b16 %v19
  %v52 = vunpack.c.l.b16 %v20
  %v53 = vunpack.c.l.b16 %v21
  %v54 = vunpack.c.l.b16 %v22
  %v55 = vpack.c.b16 %v48, %v47
  %v56 = vpack.c.b16 %v50, %v49
  %v57 = vpack.c.b16 %v52, %v51
  %v58 = vpack.c.b16 %v54, %v53
  %v68 = vunpack.c.l.b16 %v23
  %v69 = vunpack.c.l.b16 %v24
  %v70 = vunpack.c.l.b16 %v25
  %v71 = vunpack.c.l.b16 %v26
  %v72 = vunpack.c.l.b16 %v27
  %v73 = vunpack.c.l.b16 %v28
  %v74 = vunpack.c.l.b16 %v29
  %v75 = vunpack.c.l.b16 %v30
  %v76 = vunpack.c.l.b16 %v31
  %v77 = vpack.c.b16 %v69, %v68
  %v78 = vpack.c.b16 %v71, %v70
  %v79 = vpack.c.b16 %v73, %v72
  %v80 = vpack.c.b16 %v75, %v74
  %v81 = vpack.c.b16 %v76, %v76
  %vm86 = vcmask 588800
  %v88 = vsel %vm86, %v55, 0
  %v91 = vsel %vm86, %v56, 0
  %v94 = vsel %vm86, %v57, 0
  %v97 = vsel %vm86, %v58, 0
  %vm99 = vcmask 1043456
  %v101 = vsel %vm99, %v81, 0
  %103 = vmatprep.subr.bf16.mxu0 0
  %104 = vmatpush1.bf16.msra.mxu0 %v77
  %105 = vmatprep.subr.bf16.mxu0 0
  %106 = vmatpush1.bf16.msra.mxu0 %v78
  %107 = vmatprep.subr.bf16.mxu0 0
  %108 = vmatpush1.bf16.msra.mxu0 %v79
  %109 = vmatprep.subr.bf16.mxu0 0
  %110 = vmatpush1.bf16.msra.mxu0 %v80
  %111 = vmatprep.subr.bf16.mxu0 0
  %112 = vmatpush1.bf16.msra.mxu0 %v101
  %113 = vmatprep.subr.bf16.mxu0 0
  %114 = vmatpush1.bf16.msra.mxu0 0
  %115 = vmatprep.subr.bf16.mxu0 0
  %116 = vmatpush1.bf16.msra.mxu0 0
  %117 = vmatprep.subr.bf16.mxu0 0
  %118 = vmatpush1.bf16.msra.mxu0 0
  %119 = vmatprep.subr.bf16.mxu0 0
  %120 = vmatpush1.bf16.msra.mxu0 0
  %121 = vmatprep.subr.bf16.mxu0 0
  %122 = vmatpush1.bf16.msra.mxu0 0
  %123 = vmatprep.subr.bf16.mxu0 0
  %124 = vmatpush1.bf16.msra.mxu0 0
  %125 = vmatprep.subr.bf16.mxu0 0
  %126 = vmatpush1.bf16.msra.mxu0 0
  %127 = vmatprep.subr.bf16.mxu0 0
  %128 = vmatpush1.bf16.msra.mxu0 0
  %129 = vmatprep.subr.bf16.mxu0 0
  %130 = vmatpush1.bf16.msra.mxu0 0
  %131 = vmatprep.subr.bf16.mxu0 0
  %132 = vmatpush1.bf16.msra.mxu0 0
  %133 = vmatprep.subr.bf16.mxu0 0
  %134 = vmatpush1.bf16.msra.mxu0 0
  %135 = vmatprep.mubr.bf16.mxu0 0
  %136 = vmatmul.mubr.bf16.gmra.mrb[0].mxu0 %v88
  %v137 = vpop.f32.mrb[0].mxu0
  %v138 = vadd.f32 %v37, %v137
  %v139 = vpop.f32.mrb[0].mxu0
  %v140 = vpop.f32.mrb[0].mxu0
  %v141 = vadd.f32 %v37, %v140
  %v142 = vpop.f32.mrb[0].mxu0
  %143 = vmatprep.mubr.bf16.mxu0 0
  %144 = vmatmul.mubr.bf16.gmra.mrb[0].mxu0 %v91
  %v145 = vpop.f32.mrb[0].mxu0
  %v146 = vadd.f32 %v37, %v145
  %v147 = vpop.f32.mrb[0].mxu0
  %v148 = vpop.f32.mrb[0].mxu0
  %v149 = vadd.f32 %v37, %v148
  %v150 = vpop.f32.mrb[0].mxu0
  %151 = vmatprep.mubr.bf16.mxu0 0
  %152 = vmatmul.mubr.bf16.gmra.mrb[0].mxu0 %v94
  %v153 = vpop.f32.mrb[0].mxu0
  %v154 = vadd.f32 %v37, %v153
  %v155 = vpop.f32.mrb[0].mxu0
  %v156 = vpop.f32.mrb[0].mxu0
  %v157 = vadd.f32 %v37, %v156
  %v158 = vpop.f32.mrb[0].mxu0
  %159 = vmatprep.mubr.bf16.mxu0 0
  %160 = vmatmul.mubr.bf16.gmra.mrb[0].mxu0 %v97
  %v161 = vpop.f32.mrb[0].mxu0
  %v162 = vadd.f32 %v37, %v161
  %v163 = vpop.f32.mrb[0].mxu0
  %v164 = vpop.f32.mrb[0].mxu0
  %v165 = vadd.f32 %v37, %v164
  %v166 = vpop.f32.mrb[0].mxu0
  %167 = vdwg.mxu0
  %v168 = vmax.f32 %v138, 0.0
  %v169 = vmax.f32 %v141, 0.0
  %v170 = vmax.f32 %v146, 0.0
  %v171 = vmax.f32 %v149, 0.0
  %v172 = vmax.f32 %v154, 0.0
  %v173 = vmax.f32 %v157, 0.0
  %v174 = vmax.f32 %v162, 0.0
  %v175 = vmax.f32 %v165, 0.0
  %vm176 = vcmask 130048
  %177 = vst.msk [vmem:[%s3] sm:$0xff] %vm176, %v168
  %178 = vst.msk [vmem:[%s3 + $0x8] sm:$0xff] %vm176, %v169
  %179 = vst.msk [vmem:[%s3 + $0x10] sm:$0xff] %vm176, %v170
  %180 = vst.msk [vmem:[%s3 + $0x18] sm:$0xff] %vm176, %v171
  %181 = vst.msk [vmem:[%s3 + $0x20] sm:$0xff] %vm176, %v172
  %182 = vst.msk [vmem:[%s3 + $0x28] sm:$0xff] %vm176, %v173
  %183 = vst.msk [vmem:[%s3 + $0x30] sm:$0xff] %vm176, %v174
  %184 = vst.msk [vmem:[%s3 + $0x38] sm:$0xff] %vm176, %v175
  // Predicated region
  $region14: #{perceptual_loss.11} parent=0 // pred_check
    _
  $region15: #{perceptual_loss.11} parent=0 // pred_check_branch
    %186 = sbr.rel (0) target = $region17
  $region16: #{perceptual_loss.11} parent=0 // pred_region
    _
  $region17: #{perceptual_loss.11} parent=0 // pred_fallthru
    _
  // Predicated region
  $region18: #{perceptual_loss.11} parent=0 // pred_check
    _
  $region19: #{perceptual_loss.11} parent=0 // pred_check_branch
    %188 = sbr.rel (0) target = $region21
  $region20: #{perceptual_loss.11} parent=0 // pred_region
    _
  $region21: #{perceptual_loss.11} parent=0 // pred_fallthru
    _

// kernel: perceptual_loss.12
$region0: #{perceptual_loss.12}
  #allocation0 [shape = 'u32[]', space=smem, size = 0x4, offset = 0x4, fixed_abs, tag = 'smem constant byte address 0x4 - core index']
  #allocation1 [shape = 'u32[144,128]{1,0:T(1,128)}', space=vmem, size = 0x12000, scoped, tag = 'internal scratch']
  %s0 = inlined_call_operand.vmem [shape: bf16[16,144], index: 0, kind: input, shape index: {}]
  %s1 = inlined_call_operand.vmem [shape: bf16[144,32], index: 1, kind: input, shape index: {}]
  %s2 = inlined_call_operand.vmem [shape: f32[1,32], index: 2, kind: input, shape index: {}]
  %s3 = inlined_call_operand.vmem [shape: f32[16,32], index: 3, kind: output, shape index: {}]
  %s4 = sld [smem:[#allocation0]]
  $region22: #{perceptual_loss.12} parent=0
    _
  %s6 = ssub.s32 1, %s4
  %s7 = scalar_select 0, %s6, %s4
  // Predicated region
  $region2: #{perceptual_loss.12} parent=0 // pred_check
    _
  $region3: #{perceptual_loss.12} parent=0 // pred_check_branch
    %9 = sbr.rel (0) target = $region5
  $region4: #{perceptual_loss.12} parent=0 // pred_region
    _
  $region5: #{perceptual_loss.12} parent=0 // pred_fallthru
    _
  // Predicated region
  $region6: #{perceptual_loss.12} parent=0 // pred_check
    _
  $region7: #{perceptual_loss.12} parent=0 // pred_check_branch
    %11 = sbr.rel (0) target = $region9
  $region8: #{perceptual_loss.12} parent=0 // pred_region
    _
  $region9: #{perceptual_loss.12} parent=0 // pred_fallthru
    _
  // Predicated region
  $region10: #{perceptual_loss.12} parent=0 // pred_check
    _
  $region11: #{perceptual_loss.12} parent=0 // pred_check_branch
    %13 = sbr.rel (0) target = $region13
  $region12: #{perceptual_loss.12} parent=0 // pred_region
    _
  $region13: #{perceptual_loss.12} parent=0 // pred_fallthru
    _
  %v15 = vld [vmem:[%s0] sm:$0xff]
  %v16 = vld [vmem:[%s0 + $0x8] sm:$0xff]
  %v17 = vld [vmem:[%s1] sm:$0xf]
  %v18 = vld [vmem:[%s1 + $0x4] sm:$0xf]
  %v19 = vld [vmem:[%s1 + $0x8] sm:$0xf]
  %v20 = vld [vmem:[%s1 + $0xc] sm:$0xf]
  %v21 = vld [vmem:[%s1 + $0x10] sm:$0xf]
  %v22 = vld [vmem:[%s1 + $0x14] sm:$0xf]
  %v23 = vld [vmem:[%s1 + $0x18] sm:$0xf]
  %v24 = vld [vmem:[%s1 + $0x1c] sm:$0xf]
  %v25 = vld [vmem:[%s1 + $0x20] sm:$0xf]
  %v26 = vld [vmem:[%s1 + $0x24] sm:$0xf]
  %v27 = vld [vmem:[%s1 + $0x28] sm:$0xf]
  %v28 = vld [vmem:[%s1 + $0x2c] sm:$0xf]
  %v29 = vld [vmem:[%s1 + $0x30] sm:$0xf]
  %v30 = vld [vmem:[%s1 + $0x34] sm:$0xf]
  %v31 = vld [vmem:[%s1 + $0x38] sm:$0xf]
  %v32 = vld [vmem:[%s1 + $0x3c] sm:$0xf]
  %v33 = vld [vmem:[%s1 + $0x40] sm:$0xf]
  %v34 = vld [vmem:[%s1 + $0x44] sm:$0xf]
  %v35 = vld [vmem:[%s2] sm:$0x1]
  %v37 = vlaneseq
  %v38 = vshrl.u32 %v37, 7
  %v39 = vsub.s32 0, %v38
  %v40 = vrot.slane %v35, %v39
  %v44 = vunpack.c.l.b16 %v15
  %v45 = vunpack.c.h.b16 %v15
  %v46 = vunpack.c.l.b16 %v16
  %v47 = vunpack.c.h.b16 %v16
  %v48 = vpack.c.b16 %v46, %v44
  %v49 = vpack.c.b16 %v47, %v45
  %v69 = vunpack.c.l.b16 %v17
  %v70 = vunpack.c.l.b16 %v18
  %v71 = vunpack.c.l.b16 %v19
  %v72 = vunpack.c.l.b16 %v20
  %v73 = vunpack.c.l.b16 %v21
  %v74 = vunpack.c.l.b16 %v22
  %v75 = vunpack.c.l.b16 %v23
  %v76 = vunpack.c.l.b16 %v24
  %v77 = vunpack.c.l.b16 %v25
  %v78 = vunpack.c.l.b16 %v26
  %v79 = vunpack.c.l.b16 %v27
  %v80 = vunpack.c.l.b16 %v28
  %v81 = vunpack.c.l.b16 %v29
  %v82 = vunpack.c.l.b16 %v30
  %v83 = vunpack.c.l.b16 %v31
  %v84 = vunpack.c.l.b16 %v32
  %v85 = vunpack.c.l.b16 %v33
  %v86 = vunpack.c.l.b16 %v34
  %v87 = vpack.c.b16 %v70, %v69
  %v88 = vpack.c.b16 %v72, %v71
  %v89 = vpack.c.b16 %v74, %v73
  %v90 = vpack.c.b16 %v76, %v75
  %v91 = vpack.c.b16 %v78, %v77
  %v92 = vpack.c.b16 %v80, %v79
  %v93 = vpack.c.b16 %v82, %v81
  %v94 = vpack.c.b16 %v84, %v83
  %v95 = vpack.c.b16 %v86, %v85
  %vm105 = vcmask 130048
  %v107 = vsel %vm105, %v49, 0
  %109 = vmatprep.subr.bf16.mxu0 0
  %110 = vmatpush1.bf16.msra.mxu0 %v87
  %111 = vmatprep.subr.bf16.mxu0 0
  %112 = vmatpush1.bf16.msra.mxu0 %v88
  %113 = vmatprep.subr.bf16.mxu0 0
  %114 = vmatpush1.bf16.msra.mxu0 %v89
  %115 = vmatprep.subr.bf16.mxu0 0
  %116 = vmatpush1.bf16.msra.mxu0 %v90
  %117 = vmatprep.subr.bf16.mxu0 0
  %118 = vmatpush1.bf16.msra.mxu0 %v91
  %119 = vmatprep.subr.bf16.mxu0 0
  %120 = vmatpush1.bf16.msra.mxu0 %v92
  %121 = vmatprep.subr.bf16.mxu0 0
  %122 = vmatpush1.bf16.msra.mxu0 %v93
  %123 = vmatprep.subr.bf16.mxu0 0
  %124 = vmatpush1.bf16.msra.mxu0 %v94
  %125 = vmatprep.subr.bf16.mxu0 0
  %126 = vmatpush1.bf16.msra.mxu0 %v95
  %127 = vmatprep.subr.bf16.mxu0 0
  %128 = vmatpush1.bf16.msra.mxu0 0
  %129 = vmatprep.subr.bf16.mxu0 0
  %130 = vmatpush1.bf16.msra.mxu0 0
  %131 = vmatprep.subr.bf16.mxu0 0
  %132 = vmatpush1.bf16.msra.mxu0 0
  %133 = vmatprep.subr.bf16.mxu0 0
  %134 = vmatpush1.bf16.msra.mxu0 0
  %135 = vmatprep.subr.bf16.mxu0 0
  %136 = vmatpush1.bf16.msra.mxu0 0
  %137 = vmatprep.subr.bf16.mxu0 0
  %138 = vmatpush1.bf16.msra.mxu0 0
  %139 = vmatprep.subr.bf16.mxu0 0
  %140 = vmatpush1.bf16.msra.mxu0 0
  %141 = vmatprep.mubr.bf16.mxu0 %v107
  %142 = vmatmul.mubr.bf16.gmra.mrb[0].mxu0 %v48
  %v143 = vpop.f32.mrb[0].mxu0
  %v144 = vadd.f32 %v40, %v143
  %v145 = vpop.f32.mrb[0].mxu0
  %v146 = vpop.f32.mrb[0].mxu0
  %v147 = vadd.f32 %v40, %v146
  %v148 = vpop.f32.mrb[0].mxu0
  %149 = vdwg.mxu0
  %v150 = vmax.f32 %v144, 0.0
  %v151 = vmax.f32 %v147, 0.0
  %vm152 = vcmask 261120
  %153 = vst.msk [vmem:[%s3] sm:$0xff] %vm152, %v150
  %154 = vst.msk [vmem:[%s3 + $0x8] sm:$0xff] %vm152, %v151
  // Predicated region
  $region14: #{perceptual_loss.12} parent=0 // pred_check
    _
  $region15: #{perceptual_loss.12} parent=0 // pred_check_branch
    %156 = sbr.rel (0) target = $region17
  $region16: #{perceptual_loss.12} parent=0 // pred_region
    _
  $region17: #{perceptual_loss.12} parent=0 // pred_fallthru
    _
  // Predicated region
  $region18: #{perceptual_loss.12} parent=0 // pred_check
    _
  $region19: #{perceptual_loss.12} parent=0 // pred_check_branch
    %158 = sbr.rel (0) target = $region21
  $region20: #{perceptual_loss.12} parent=0 // pred_region
    _
  $region21: #{perceptual_loss.12} parent=0 // pred_fallthru
    _

// kernel: perceptual_loss.13
$region0: #{perceptual_loss.13}
  #allocation0 [shape = 'u32[]', space=smem, size = 0x4, offset = 0x4, fixed_abs, tag = 'smem constant byte address 0x4 - core index']
  #allocation1 [shape = 'u32[144,128]{1,0:T(1,128)}', space=vmem, size = 0x12000, scoped, tag = 'internal scratch']
  %s0 = inlined_call_operand.vmem [shape: bf16[16,288], index: 0, kind: input, shape index: {}]
  %s1 = inlined_call_operand.vmem [shape: bf16[288,32], index: 1, kind: input, shape index: {}]
  %s2 = inlined_call_operand.vmem [shape: f32[1,32], index: 2, kind: input, shape index: {}]
  %s3 = inlined_call_operand.vmem [shape: f32[16,32], index: 3, kind: output, shape index: {}]
  %s4 = sld [smem:[#allocation0]]
  $region22: #{perceptual_loss.13} parent=0
    _
  %s6 = ssub.s32 1, %s4
  %s7 = scalar_select 0, %s6, %s4
  // Predicated region
  $region2: #{perceptual_loss.13} parent=0 // pred_check
    _
  $region3: #{perceptual_loss.13} parent=0 // pred_check_branch
    %9 = sbr.rel (0) target = $region5
  $region4: #{perceptual_loss.13} parent=0 // pred_region
    _
  $region5: #{perceptual_loss.13} parent=0 // pred_fallthru
    _
  // Predicated region
  $region6: #{perceptual_loss.13} parent=0 // pred_check
    _
  $region7: #{perceptual_loss.13} parent=0 // pred_check_branch
    %11 = sbr.rel (0) target = $region9
  $region8: #{perceptual_loss.13} parent=0 // pred_region
    _
  $region9: #{perceptual_loss.13} parent=0 // pred_fallthru
    _
  // Predicated region
  $region10: #{perceptual_loss.13} parent=0 // pred_check
    _
  $region11: #{perceptual_loss.13} parent=0 // pred_check_branch
    %13 = sbr.rel (0) target = $region13
  $region12: #{perceptual_loss.13} parent=0 // pred_region
    _
  $region13: #{perceptual_loss.13} parent=0 // pred_fallthru
    _
  %v15 = vld [vmem:[%s0] sm:$0xff]
  %v16 = vld [vmem:[%s0 + $0x8] sm:$0xf]
  %v17 = vld [vmem:[%s0 + $0xc] sm:$0xff]
  %v18 = vld [vmem:[%s0 + $0x14] sm:$0xf]
  %v19 = vld [vmem:[%s1] sm:$0xf]
  %v20 = vld [vmem:[%s1 + $0x4] sm:$0xf]
  %v21 = vld [vmem:[%s1 + $0x8] sm:$0xf]
  %v22 = vld [vmem:[%s1 + $0xc] sm:$0xf]
  %v23 = vld [vmem:[%s1 + $0x10] sm:$0xf]
  %v24 = vld [vmem:[%s1 + $0x14] sm:$0xf]
  %v25 = vld [vmem:[%s1 + $0x18] sm:$0xf]
  %v26 = vld [vmem:[%s1 + $0x1c] sm:$0xf]
  %v27 = vld [vmem:[%s1 + $0x20] sm:$0xf]
  %v28 = vld [vmem:[%s1 + $0x24] sm:$0xf]
  %v29 = vld [vmem:[%s1 + $0x28] sm:$0xf]
  %v30 = vld [vmem:[%s1 + $0x2c] sm:$0xf]
  %v31 = vld [vmem:[%s1 + $0x30] sm:$0xf]
  %v32 = vld [vmem:[%s1 + $0x34] sm:$0xf]
  %v33 = vld [vmem:[%s1 + $0x38] sm:$0xf]
  %v34 = vld [vmem:[%s1 + $0x3c] sm:$0xf]
  %v35 = vld [vmem:[%s1 + $0x40] sm:$0xf]
  %v36 = vld [vmem:[%s1 + $0x44] sm:$0xf]
  %v37 = vld [vmem:[%s1 + $0x48] sm:$0xf]
  %v38 = vld [vmem:[%s1 + $0x4c] sm:$0xf]
  %v39 = vld [vmem:[%s1 + $0x50] sm:$0xf]
  %v40 = vld [vmem:[%s1 + $0x54] sm:$0xf]
  %v41 = vld [vmem:[%s1 + $0x58] sm:$0xf]
  %v42 = vld [vmem:[%s1 + $0x5c] sm:$0xf]
  %v43 = vld [vmem:[%s1 + $0x60] sm:$0xf]
  %v44 = vld [vmem:[%s1 + $0x64] sm:$0xf]
  %v45 = vld [vmem:[%s1 + $0x68] sm:$0xf]
  %v46 = vld [vmem:[%s1 + $0x6c] sm:$0xf]
  %v47 = vld [vmem:[%s1 + $0x70] sm:$0xf]
  %v48 = vld [vmem:[%s1 + $0x74] sm:$0xf]
  %v49 = vld [vmem:[%s1 + $0x78] sm:$0xf]
  %v50 = vld [vmem:[%s1 + $0x7c] sm:$0xf]
  %v51 = vld [vmem:[%s1 + $0x80] sm:$0xf]
  %v52 = vld [vmem:[%s1 + $0x84] sm:$0xf]
  %v53 = vld [vmem:[%s1 + $0x88] sm:$0xf]
  %v54 = vld [vmem:[%s1 + $0x8c] sm:$0xf]
  %v55 = vld [vmem:[%s2] sm:$0x1]
  %v57 = vlaneseq
  %v58 = vshrl.u32 %v57, 7
  %v59 = vsub.s32 0, %v58
  %v60 = vrot.slane %v55, %v59
  %v66 = vunpack.c.l.b16 %v15
  %v67 = vunpack.c.h.b16 %v15
  %v68 = vunpack.c.l.b16 %v16
  %v69 = vunpack.c.l.b16 %v17
  %v70 = vunpack.c.h.b16 %v17
  %v71 = vunpack.c.l.b16 %v18
  %v72 = vpack.c.b16 %v69, %v66
  %v73 = vpack.c.b16 %v70, %v67
  %v74 = vpack.c.b16 %v71, %v68
  %v113 = vunpack.c.l.b16 %v19
  %v114 = vunpack.c.l.b16 %v20
  %v115 = vunpack.c.l.b16 %v21
  %v116 = vunpack.c.l.b16 %v22
  %v117 = vunpack.c.l.b16 %v23
  %v118 = vunpack.c.l.b16 %v24
  %v119 = vunpack.c.l.b16 %v25
  %v120 = vunpack.c.l.b16 %v26
  %v121 = vunpack.c.l.b16 %v27
  %v122 = vunpack.c.l.b16 %v28
  %v123 = vunpack.c.l.b16 %v29
  %v124 = vunpack.c.l.b16 %v30
  %v125 = vunpack.c.l.b16 %v31
  %v126 = vunpack.c.l.b16 %v32
  %v127 = vunpack.c.l.b16 %v33
  %v128 = vunpack.c.l.b16 %v34
  %v129 = vunpack.c.l.b16 %v35
  %v130 = vunpack.c.l.b16 %v36
  %v131 = vunpack.c.l.b16 %v37
  %v132 = vunpack.c.l.b16 %v38
  %v133 = vunpack.c.l.b16 %v39
  %v134 = vunpack.c.l.b16 %v40
  %v135 = vunpack.c.l.b16 %v41
  %v136 = vunpack.c.l.b16 %v42
  %v137 = vunpack.c.l.b16 %v43
  %v138 = vunpack.c.l.b16 %v44
  %v139 = vunpack.c.l.b16 %v45
  %v140 = vunpack.c.l.b16 %v46
  %v141 = vunpack.c.l.b16 %v47
  %v142 = vunpack.c.l.b16 %v48
  %v143 = vunpack.c.l.b16 %v49
  %v144 = vunpack.c.l.b16 %v50
  %v145 = vunpack.c.l.b16 %v51
  %v146 = vunpack.c.l.b16 %v52
  %v147 = vunpack.c.l.b16 %v53
  %v148 = vunpack.c.l.b16 %v54
  %v149 = vpack.c.b16 %v114, %v113
  %v150 = vpack.c.b16 %v116, %v115
  %v151 = vpack.c.b16 %v118, %v117
  %v152 = vpack.c.b16 %v120, %v119
  %v153 = vpack.c.b16 %v122, %v121
  %v154 = vpack.c.b16 %v124, %v123
  %v155 = vpack.c.b16 %v126, %v125
  %v156 = vpack.c.b16 %v128, %v127
  %v157 = vpack.c.b16 %v130, %v129
  %v158 = vpack.c.b16 %v132, %v131
  %v159 = vpack.c.b16 %v134, %v133
  %v160 = vpack.c.b16 %v136, %v135
  %v161 = vpack.c.b16 %v138, %v137
  %v162 = vpack.c.b16 %v140, %v139
  %v163 = vpack.c.b16 %v142, %v141
  %v164 = vpack.c.b16 %v144, %v143
  %v165 = vpack.c.b16 %v146, %v145
  %v166 = vpack.c.b16 %v148, %v147
  %vm185 = vcmask 261120
  %v187 = vsel %vm185, %v74, 0
  %189 = vmatprep.subr.bf16.mxu0 0
  %190 = vmatpush1.bf16.msra.mxu0 %v149
  %191 = vmatprep.subr.bf16.mxu0 0
  %192 = vmatpush1.bf16.msra.mxu0 %v150
  %193 = vmatprep.subr.bf16.mxu0 0
  %194 = vmatpush1.bf16.msra.mxu0 %v151
  %195 = vmatprep.subr.bf16.mxu0 0
  %196 = vmatpush1.bf16.msra.mxu0 %v152
  %197 = vmatprep.subr.bf16.mxu0 0
  %198 = vmatpush1.bf16.msra.mxu0 %v153
  %199 = vmatprep.subr.bf16.mxu0 0
  %200 = vmatpush1.bf16.msra.mxu0 %v154
  %201 = vmatprep.subr.bf16.mxu0 0
  %202 = vmatpush1.bf16.msra.mxu0 %v155
  %203 = vmatprep.subr.bf16.mxu0 0
  %204 = vmatpush1.bf16.msra.mxu0 %v156
  %205 = vmatprep.subr.bf16.mxu0 0
  %206 = vmatpush1.bf16.msra.mxu0 %v157
  %207 = vmatprep.subr.bf16.mxu0 0
  %208 = vmatpush1.bf16.msra.mxu0 %v158
  %209 = vmatprep.subr.bf16.mxu0 0
  %210 = vmatpush1.bf16.msra.mxu0 %v159
  %211 = vmatprep.subr.bf16.mxu0 0
  %212 = vmatpush1.bf16.msra.mxu0 %v160
  %213 = vmatprep.subr.bf16.mxu0 0
  %214 = vmatpush1.bf16.msra.mxu0 %v161
  %215 = vmatprep.subr.bf16.mxu0 0
  %216 = vmatpush1.bf16.msra.mxu0 %v162
  %217 = vmatprep.subr.bf16.mxu0 0
  %218 = vmatpush1.bf16.msra.mxu0 %v163
  %219 = vmatprep.subr.bf16.mxu0 0
  %220 = vmatpush1.bf16.msra.mxu0 %v164
  %221 = vmatprep.mubr.bf16.mxu0 %v73
  %222 = vmatmul.mubr.bf16.gmra.mrb[0].mxu0 %v72
  %v223 = vpop.f32.mrb[0].mxu0
  %v224 = vadd.f32 %v60, %v223
  %v225 = vpop.f32.mrb[0].mxu0
  %v226 = vpop.f32.mrb[0].mxu0
  %v227 = vadd.f32 %v60, %v226
  %v228 = vpop.f32.mrb[0].mxu0
  %229 = vdwg.mxu0
  %230 = vmatprep.subr.bf16.mxu0 0
  %231 = vmatpush1.bf16.msra.mxu0 %v165
  %232 = vmatprep.subr.bf16.mxu0 0
  %233 = vmatpush1.bf16.msra.mxu0 %v166
  %234 = vmatprep.subr.bf16.mxu0 0
  %235 = vmatpush1.bf16.msra.mxu0 0
  %236 = vmatprep.subr.bf16.mxu0 0
  %237 = vmatpush1.bf16.msra.mxu0 0
  %238 = vmatprep.subr.bf16.mxu0 0
  %239 = vmatpush1.bf16.msra.mxu0 0
  %240 = vmatprep.subr.bf16.mxu0 0
  %241 = vmatpush1.bf16.msra.mxu0 0
  %242 = vmatprep.subr.bf16.mxu0 0
  %243 = vmatpush1.bf16.msra.mxu0 0
  %244 = vmatprep.subr.bf16.mxu0 0
  %245 = vmatpush1.bf16.msra.mxu0 0
  %246 = vmatprep.subr.bf16.mxu0 0
  %247 = vmatpush1.bf16.msra.mxu0 0
  %248 = vmatprep.subr.bf16.mxu0 0
  %249 = vmatpush1.bf16.msra.mxu0 0
  %250 = vmatprep.subr.bf16.mxu0 0
  %251 = vmatpush1.bf16.msra.mxu0 0
  %252 = vmatprep.subr.bf16.mxu0 0
  %253 = vmatpush1.bf16.msra.mxu0 0
  %254 = vmatprep.subr.bf16.mxu0 0
  %255 = vmatpush1.bf16.msra.mxu0 0
  %256 = vmatprep.subr.bf16.mxu0 0
  %257 = vmatpush1.bf16.msra.mxu0 0
  %258 = vmatprep.subr.bf16.mxu0 0
  %259 = vmatpush1.bf16.msra.mxu0 0
  %260 = vmatprep.subr.bf16.mxu0 0
  %261 = vmatpush1.bf16.msra.mxu0 0
  %262 = vmatprep.mubr.bf16.mxu0 0
  %263 = vmatmul.mubr.bf16.gmra.mrb[0].mxu0 %v187
  %v264 = vpop.f32.mrb[0].mxu0
  %v265 = vadd.f32 %v224, %v264
  %v266 = vpop.f32.mrb[0].mxu0
  %v267 = vpop.f32.mrb[0].mxu0
  %v268 = vadd.f32 %v227, %v267
  %v269 = vpop.f32.mrb[0].mxu0
  %270 = vdwg.mxu0
  %v271 = vmax.f32 %v265, 0.0
  %v272 = vmax.f32 %v268, 0.0
  %273 = vst.msk [vmem:[%s3] sm:$0xff] %vm185, %v271
  %274 = vst.msk [vmem:[%s3 + $0x8] sm:$0xff] %vm185, %v272
  // Predicated region
  $region14: #{perceptual_loss.13} parent=0 // pred_check
    _
  $region15: #{perceptual_loss.13} parent=0 // pred_check_branch
    %276 = sbr.rel (0) target = $region17
  $region16: #{perceptual_loss.13} parent=0 // pred_region
    _
  $region17: #{perceptual_loss.13} parent=0 // pred_fallthru
    _
  // Predicated region
  $region18: #{perceptual_loss.13} parent=0 // pred_check
    _
  $region19: #{perceptual_loss.13} parent=0 // pred_check_branch
    %278 = sbr.rel (0) target = $region21
  $region20: #{perceptual_loss.13} parent=0 // pred_region
    _
  $region21: #{perceptual_loss.13} parent=0 // pred_fallthru
    _

// kernel: perceptual_loss.19
$region0: #{perceptual_loss.19}
  #allocation0 [shape = 'u32[]', space=smem, size = 0x4, offset = 0x4, fixed_abs, tag = 'smem constant byte address 0x4 - core index']
  #allocation1 [shape = 'u32[144,128]{1,0:T(1,128)}', space=vmem, size = 0x12000, scoped, tag = 'internal scratch']
  #allocation2 [shape = 'f32[1,1]{1,0:T(1,128)}', space=vmem, size = 0x200, scoped, tag = 'scratch operand']
  %s0 = inlined_call_operand.vmem [shape: f32[8,128], index: 0, kind: input, shape index: {}]
  %s1 = inlined_call_operand.vmem [shape: f32[8,128], index: 1, kind: input, shape index: {}]
  %s2 = inlined_call_operand.hbm [shape: f32[1,1], index: 2, kind: output, shape index: {}]
  %s3 = sld [smem:[#allocation0]]
  $region26: #{perceptual_loss.19} parent=0
    _
  %s5 = ssub.s32 1, %s3
  %s6 = scalar_select 0, %s5, %s3
  $region1: #{perceptual_loss.19} parent=0
    #allocation3 [shape = 'u8[512]{0}', space=vmem, size = 0x400, scoped, tag = 'output window, operand 0, single buffered']
    #allocation4 [shape = 's32[1]{0}', space=sflag, size = 0x4, scoped, tag = 'scoped memory for perceptual_loss.19']
    %7 = vsyncpa [#allocation4], 0
    // Predicated region
    $region2: #{perceptual_loss.19} parent=1 // pred_check
      _
    $region3: #{perceptual_loss.19} parent=1 // pred_check_branch
      %9 = sbr.rel (0) target = $region5
    $region4: #{perceptual_loss.19} parent=1 // pred_region
      _
    $region5: #{perceptual_loss.19} parent=1 // pred_fallthru
      _
    // Predicated region
    $region6: #{perceptual_loss.19} parent=1 // pred_check
      _
    $region7: #{perceptual_loss.19} parent=1 // pred_check_branch
      %11 = sbr.rel (0) target = $region9
    $region8: #{perceptual_loss.19} parent=1 // pred_region
      _
    $region9: #{perceptual_loss.19} parent=1 // pred_fallthru
      _
    %p12 = scmp.eq.s32.totalorder 0, 0
    // Predicated region
    $region10: #{perceptual_loss.19} parent=1 // pred_check
      %p13 = pneg %p12
    $region11: #{perceptual_loss.19} parent=1 // pred_check_branch
      %15 = sbr.rel (%p13) target = $region13
    $region12: #{perceptual_loss.19} parent=1 // pred_region
      %vm16 = vcmask 0
      %17 = vst.msk [vmem:[#allocation2] sm:$0x1] %vm16, 0.0
    $region13: #{perceptual_loss.19} parent=1 // pred_fallthru
      _
    %v18 = vld [vmem:[#allocation2] sm:$0x1]
    %v19 = vld [vmem:[%s0] sm:$0xff]
    %v20 = vld [vmem:[%s1] sm:$0xff]
    %v21 = vsub.f32 %v19, %v20
    %v22 = vand.u32 2147483647, %v21
    %23 = vadd.xlane.f32.xlu0 %v22
    %v24 = vpop.xlane.xlu0 %23
    %v25 = vrot.slane %v24, 4
    %v26 = vadd.f32 %v24, %v25
    %v27 = vrot.slane %v26, 2
    %v28 = vadd.f32 %v26, %v27
    %v29 = vrot.slane %v28, 1
    %v30 = vadd.f32 %v28, %v29
    %s31 = vtos %v30
    %v32 = vstv %s31
    %v33 = vadd.f32 %v18, %v32
    %vm34 = vcmask 0
    %35 = vst.msk [vmem:[#allocation2] sm:$0x1] %vm34, %v33
    // Predicated region
    $region14: #{perceptual_loss.19} parent=1 // pred_check
      %p36 = pneg %p12
    $region15: #{perceptual_loss.19} parent=1 // pred_check_branch
      %38 = sbr.rel (%p36) target = $region17
    $region16: #{perceptual_loss.19} parent=1 // pred_region
      %v39 = vld [vmem:[#allocation2] sm:$0x1]
      %v40 = vmul.f32 %v39, 0.00390625
      %41 = vst.msk [vmem:[#allocation3] sm:$0x1] %vm34, %v40
    $region17: #{perceptual_loss.19} parent=1 // pred_fallthru
      _
    // Predicated region
    $region18: #{perceptual_loss.19} parent=1 // pred_check
      _
    $region19: #{perceptual_loss.19} parent=1 // pred_check_branch
      %43 = sbr.rel (0) target = $region21
    $region20: #{perceptual_loss.19} parent=1 // pred_region
      %s45 = ssub.s32 16, 16
      %46 = vsyncadd [#allocation4], %s45
      %s48 = sshll.u32 [#allocation3], 4
      %s49 = int_to_ptr.vmem [resolvable:$true] %s48
      %51 = dma.vmem_to_hbm [thread:$0]  %s49, 16, %s2, [#allocation4]
    $region21: #{perceptual_loss.19} parent=1 // pred_fallthru
      _
    // Predicated region
    $region22: #{perceptual_loss.19} parent=1 // pred_check
      _
    $region23: #{perceptual_loss.19} parent=1 // pred_check_branch
      %53 = sbr.rel (0) target = $region25
    $region24: #{perceptual_loss.19} parent=1 // pred_region
      %54 = dma.done [#allocation4], 16
    $region25: #{perceptual_loss.19} parent=1 // pred_fallthru
      _
    %55 = vsyncpa [#allocation4], 1

// kernel: perceptual_loss.17
$region0: #{perceptual_loss.17}
  #allocation0 [shape = 'u32[]', space=smem, size = 0x4, offset = 0x4, fixed_abs, tag = 'smem constant byte address 0x4 - core index']
  #allocation1 [shape = 'u32[144,128]{1,0:T(1,128)}', space=vmem, size = 0x12000, scoped, tag = 'internal scratch']
  #allocation2 [shape = 'f32[1,1]{1,0:T(1,128)}', space=vmem, size = 0x200, scoped, tag = 'scratch operand']
  %s0 = inlined_call_operand.vmem [shape: f32[8,128], index: 0, kind: input, shape index: {}]
  %s1 = inlined_call_operand.vmem [shape: f32[8,128], index: 1, kind: input, shape index: {}]
  %s2 = inlined_call_operand.hbm [shape: f32[1,1], index: 2, kind: output, shape index: {}]
  %s3 = sld [smem:[#allocation0]]
  $region26: #{perceptual_loss.17} parent=0
    _
  %s5 = ssub.s32 1, %s3
  %s6 = scalar_select 0, %s5, %s3
  $region1: #{perceptual_loss.17} parent=0
    #allocation3 [shape = 'u8[512]{0}', space=vmem, size = 0x400, scoped, tag = 'output window, operand 0, single buffered']
    #allocation4 [shape = 's32[1]{0}', space=sflag, size = 0x4, scoped, tag = 'scoped memory for perceptual_loss.17']
    %7 = vsyncpa [#allocation4], 0
    // Predicated region
    $region2: #{perceptual_loss.17} parent=1 // pred_check
      _
    $region3: #{perceptual_loss.17} parent=1 // pred_check_branch
      %9 = sbr.rel (0) target = $region5
    $region4: #{perceptual_loss.17} parent=1 // pred_region
      _
    $region5: #{perceptual_loss.17} parent=1 // pred_fallthru
      _
    // Predicated region
    $region6: #{perceptual_loss.17} parent=1 // pred_check
      _
    $region7: #{perceptual_loss.17} parent=1 // pred_check_branch
      %11 = sbr.rel (0) target = $region9
    $region8: #{perceptual_loss.17} parent=1 // pred_region
      _
    $region9: #{perceptual_loss.17} parent=1 // pred_fallthru
      _
    %p12 = scmp.eq.s32.totalorder 0, 0
    // Predicated region
    $region10: #{perceptual_loss.17} parent=1 // pred_check
      %p13 = pneg %p12
    $region11: #{perceptual_loss.17} parent=1 // pred_check_branch
      %15 = sbr.rel (%p13) target = $region13
    $region12: #{perceptual_loss.17} parent=1 // pred_region
      %vm16 = vcmask 0
      %17 = vst.msk [vmem:[#allocation2] sm:$0x1] %vm16, 0.0
    $region13: #{perceptual_loss.17} parent=1 // pred_fallthru
      _
    %v18 = vld [vmem:[#allocation2] sm:$0x1]
    %v19 = vld [vmem:[%s0] sm:$0xff]
    %v20 = vld [vmem:[%s1] sm:$0xff]
    %v21 = vsub.f32 %v19, %v20
    %v22 = vand.u32 2147483647, %v21
    %23 = vadd.xlane.f32.xlu0 %v22
    %v24 = vpop.xlane.xlu0 %23
    %v25 = vrot.slane %v24, 4
    %v26 = vadd.f32 %v24, %v25
    %v27 = vrot.slane %v26, 2
    %v28 = vadd.f32 %v26, %v27
    %v29 = vrot.slane %v28, 1
    %v30 = vadd.f32 %v28, %v29
    %s31 = vtos %v30
    %v32 = vstv %s31
    %v33 = vadd.f32 %v18, %v32
    %vm34 = vcmask 0
    %35 = vst.msk [vmem:[#allocation2] sm:$0x1] %vm34, %v33
    // Predicated region
    $region14: #{perceptual_loss.17} parent=1 // pred_check
      %p36 = pneg %p12
    $region15: #{perceptual_loss.17} parent=1 // pred_check_branch
      %38 = sbr.rel (%p36) target = $region17
    $region16: #{perceptual_loss.17} parent=1 // pred_region
      %v39 = vld [vmem:[#allocation2] sm:$0x1]
      %v40 = vmul.f32 %v39, 0.001953125
      %41 = vst.msk [vmem:[#allocation3] sm:$0x1] %vm34, %v40
    $region17: #{perceptual_loss.17} parent=1 // pred_fallthru
      _
    // Predicated region
    $region18: #{perceptual_loss.17} parent=1 // pred_check
      _
    $region19: #{perceptual_loss.17} parent=1 // pred_check_branch
      %43 = sbr.rel (0) target = $region21
    $region20: #{perceptual_loss.17} parent=1 // pred_region
      %s45 = ssub.s32 16, 16
      %46 = vsyncadd [#allocation4], %s45
      %s48 = sshll.u32 [#allocation3], 4
      %s49 = int_to_ptr.vmem [resolvable:$true] %s48
      %51 = dma.vmem_to_hbm [thread:$0]  %s49, 16, %s2, [#allocation4]
    $region21: #{perceptual_loss.17} parent=1 // pred_fallthru
      _
    // Predicated region
    $region22: #{perceptual_loss.17} parent=1 // pred_check
      _
    $region23: #{perceptual_loss.17} parent=1 // pred_check_branch
      %53 = sbr.rel (0) target = $region25
    $region24: #{perceptual_loss.17} parent=1 // pred_region
      %54 = dma.done [#allocation4], 16
    $region25: #{perceptual_loss.17} parent=1 // pred_fallthru
      _
    %55 = vsyncpa [#allocation4], 1

// kernel: perceptual_loss.16
$region0: #{perceptual_loss.16}
  #allocation0 [shape = 'u32[]', space=smem, size = 0x4, offset = 0x4, fixed_abs, tag = 'smem constant byte address 0x4 - core index']
  #allocation1 [shape = 'u32[144,128]{1,0:T(1,128)}', space=vmem, size = 0x12000, scoped, tag = 'internal scratch']
  #allocation2 [shape = 'f32[1,1]{1,0:T(1,128)}', space=vmem, size = 0x200, scoped, tag = 'scratch operand']
  %s0 = inlined_call_operand.vmem [shape: f32[8,128], index: 0, kind: input, shape index: {}]
  %s1 = inlined_call_operand.vmem [shape: f32[8,128], index: 1, kind: input, shape index: {}]
  %s2 = inlined_call_operand.hbm [shape: f32[1,1], index: 2, kind: output, shape index: {}]
  %s3 = sld [smem:[#allocation0]]
  $region26: #{perceptual_loss.16} parent=0
    _
  %s5 = ssub.s32 1, %s3
  %s6 = scalar_select 0, %s5, %s3
  $region1: #{perceptual_loss.16} parent=0
    #allocation3 [shape = 'u8[512]{0}', space=vmem, size = 0x400, scoped, tag = 'output window, operand 0, single buffered']
    #allocation4 [shape = 's32[1]{0}', space=sflag, size = 0x4, scoped, tag = 'scoped memory for perceptual_loss.16']
    %7 = vsyncpa [#allocation4], 0
    // Predicated region
    $region2: #{perceptual_loss.16} parent=1 // pred_check
      _
    $region3: #{perceptual_loss.16} parent=1 // pred_check_branch
      %9 = sbr.rel (0) target = $region5
    $region4: #{perceptual_loss.16} parent=1 // pred_region
      _
    $region5: #{perceptual_loss.16} parent=1 // pred_fallthru
      _
    // Predicated region
    $region6: #{perceptual_loss.16} parent=1 // pred_check
      _
    $region7: #{perceptual_loss.16} parent=1 // pred_check_branch
      %11 = sbr.rel (0) target = $region9
    $region8: #{perceptual_loss.16} parent=1 // pred_region
      _
    $region9: #{perceptual_loss.16} parent=1 // pred_fallthru
      _
    %p12 = scmp.eq.s32.totalorder 0, 0
    // Predicated region
    $region10: #{perceptual_loss.16} parent=1 // pred_check
      %p13 = pneg %p12
    $region11: #{perceptual_loss.16} parent=1 // pred_check_branch
      %15 = sbr.rel (%p13) target = $region13
    $region12: #{perceptual_loss.16} parent=1 // pred_region
      %vm16 = vcmask 0
      %17 = vst.msk [vmem:[#allocation2] sm:$0x1] %vm16, 0.0
    $region13: #{perceptual_loss.16} parent=1 // pred_fallthru
      _
    %v18 = vld [vmem:[#allocation2] sm:$0x1]
    %v19 = vld [vmem:[%s0] sm:$0xff]
    %v20 = vld [vmem:[%s1] sm:$0xff]
    %v21 = vsub.f32 %v19, %v20
    %v22 = vand.u32 2147483647, %v21
    %23 = vadd.xlane.f32.xlu0 %v22
    %v24 = vpop.xlane.xlu0 %23
    %v25 = vrot.slane %v24, 4
    %v26 = vadd.f32 %v24, %v25
    %v27 = vrot.slane %v26, 2
    %v28 = vadd.f32 %v26, %v27
    %v29 = vrot.slane %v28, 1
    %v30 = vadd.f32 %v28, %v29
    %s31 = vtos %v30
    %v32 = vstv %s31
    %v33 = vadd.f32 %v18, %v32
    %vm34 = vcmask 0
    %35 = vst.msk [vmem:[#allocation2] sm:$0x1] %vm34, %v33
    // Predicated region
    $region14: #{perceptual_loss.16} parent=1 // pred_check
      %p36 = pneg %p12
    $region15: #{perceptual_loss.16} parent=1 // pred_check_branch
      %38 = sbr.rel (%p36) target = $region17
    $region16: #{perceptual_loss.16} parent=1 // pred_region
      %v39 = vld [vmem:[#allocation2] sm:$0x1]
      %v40 = vmul.f32 %v39, 0.0009765625
      %41 = vst.msk [vmem:[#allocation3] sm:$0x1] %vm34, %v40
    $region17: #{perceptual_loss.16} parent=1 // pred_fallthru
      _
    // Predicated region
    $region18: #{perceptual_loss.16} parent=1 // pred_check
      _
    $region19: #{perceptual_loss.16} parent=1 // pred_check_branch
      %43 = sbr.rel (0) target = $region21
    $region20: #{perceptual_loss.16} parent=1 // pred_region
      %s45 = ssub.s32 16, 16
      %46 = vsyncadd [#allocation4], %s45
      %s48 = sshll.u32 [#allocation3], 4
      %s49 = int_to_ptr.vmem [resolvable:$true] %s48
      %51 = dma.vmem_to_hbm [thread:$0]  %s49, 16, %s2, [#allocation4]
    $region21: #{perceptual_loss.16} parent=1 // pred_fallthru
      _
    // Predicated region
    $region22: #{perceptual_loss.16} parent=1 // pred_check
      _
    $region23: #{perceptual_loss.16} parent=1 // pred_check_branch
      %53 = sbr.rel (0) target = $region25
    $region24: #{perceptual_loss.16} parent=1 // pred_region
      %54 = dma.done [#allocation4], 16
    $region25: #{perceptual_loss.16} parent=1 // pred_fallthru
      _
    %55 = vsyncpa [#allocation4], 1

</llo_original>
